<compile_context>
chip_gen: v7x
topology: tpu7x:2x2x1
jax: 0.10.0
libtpu: 0.0.40
codegen_flags: <defaults>
</compile_context>

<pallas_src>
import functools
import math

import jax
import jax.numpy as jnp
from jax.experimental import pallas as pl
from jax.experimental.pallas import tpu as pltpu


# ----------------------------------------------------------------------------
# Fused FlowISAM kernel — one grid step per batch element.
# ----------------------------------------------------------------------------
def _fused_flowisam_kernel(
        xp_ref,       # (1, S, Cin) bf16  patch-extracted, group-averaged flow
        tok_ref,      # (1, Tp, C)  f32   [iou | mask tokens | sparse prompts | pad]
        srcb_ref,     # (1, C)      f32   patch bias + "no mask" dense embedding
        pek_ref,      # (S, C)      f32   image_pe @ Wk  (precomputed)
        patchw_ref,   # (Cin, C)    bf16
        wq_ref,       # (C, C)      bf16  Wq with 1/sqrt(C) folded in
        wkv_ref,      # (C, 2C)     bf16  [Wk | Wv]
        wo_ref,       # (C, C)      bf16
        upw_ref,      # (C, P*Cu)   bf16  output-upscaling projection (4x4 subpixels)
        upb_ref,      # (1, P*Cu)   f32
        hypw_ref,     # (C, Cu)     bf16  hyper-network head
        hypb_ref,     # (1, Cu)     f32
        iouw_ref,     # (C, HW)     bf16  IoU head padded to HW lanes (cols>=Mo are 0)
        ioub_ref,     # (1, HW)     f32
        kmat_ref,     # (P*S, HW)   bf16  fused pixel-shuffle + bilinear-resize matrix
        out_ref,      # out: (1, Mo+1, HW) f32  rows 0..Mo-1 = masks, row Mo = IoU
):
    f32 = jnp.float32
    bf16 = jnp.bfloat16
    S, C = pek_ref.shape
    Cu = hypw_ref.shape[1]
    P = upw_ref.shape[1] // Cu            # 16 sub-pixel positions (4x4)
    Mo = out_ref.shape[1] - 1             # surviving mask tokens (multimask)

    xp = xp_ref[0]                        # (S, Cin) bf16
    tok = tok_ref[0]                      # (Tp, C)  f32

    # ---- flow_encoder: patch embed (group mean folded in wrapper) + dense prompt
    src = jnp.dot(xp, patchw_ref[...], preferred_element_type=f32) + srcb_ref[...]
    src_b = src.astype(bf16)

    # ---- mask_decoder: single-head token->image cross-attention + residual
    #      (scale folded into Wq, image_pe@Wk precomputed, Wk/Wv fused)
    q = jnp.dot(tok.astype(bf16), wq_ref[...], preferred_element_type=f32)   # (Tp, C)
    kv = jnp.dot(src_b, wkv_ref[...], preferred_element_type=f32)            # (S, 2C)
    k = kv[:, :C] + pek_ref[...]
    v = kv[:, C:]
    att = jax.nn.softmax(
        jnp.einsum('td,sd->ts', q, k, preferred_element_type=f32), axis=-1)  # (Tp, S)
    o = jnp.dot(att.astype(bf16), v.astype(bf16), preferred_element_type=f32)
    tok_out = tok + jnp.dot(o.astype(bf16), wo_ref[...],
                            preferred_element_type=f32)                      # (Tp, C)

    # ---- IoU head: written as the last row of the fused output (lanes >= Mo are 0)
    iou_row = (jnp.dot(tok_out[0:1, :].astype(bf16), iouw_ref[...],
                       preferred_element_type=f32) + ioub_ref[...])          # (1, HW)

    # ---- output upscaling projection + hyper-network (only surviving mask tokens)
    # TODO(synk): PyTorch nn.GELU() is exact erf; tanh approximation used here
    #             (parity vs. the reference needs a loose tolerance).
    up = jax.nn.gelu(
        jnp.dot(src_b, upw_ref[...], preferred_element_type=f32) + upb_ref[...],
        approximate=True)                                                     # (S, P*Cu)
    hyper = (jnp.dot(tok_out[2:2 + Mo, :].astype(bf16), hypw_ref[...],
                     preferred_element_type=f32) + hypb_ref[...])             # (Mo, Cu)

    # ---- masks: ONE K = P*S matmul against the fused shuffle+resize matrix.
    #   up_ps[p*S + s, c] = up[s, p*Cu + c]   (row order matches kmat rows)
    up_ps = jnp.concatenate(
        [up[:, p * Cu:(p + 1) * Cu] for p in range(P)], axis=0)              # (P*S, Cu)
    a = jnp.einsum('mc,kc->mk', hyper, up_ps,
                   preferred_element_type=f32)                               # (Mo, P*S)
    masks = jnp.dot(a.astype(bf16), kmat_ref[...],
                    preferred_element_type=f32)                               # (Mo, HW)

    out_ref[0, 0:Mo, :] = masks
    out_ref[0, Mo:Mo + 1, :] = iou_row


# ----------------------------------------------------------------------------
# Synthetic parameters (deterministic).
# TODO(synk): the injected SAM submodules (ViT-H flow encoder, two-way
# transformer mask decoder, prompt encoder) are replaced by shape-faithful
# single-layer synthetic versions.
# ----------------------------------------------------------------------------
def init_params(c_in=2, patch=8, embed_dim=32, num_mask_tokens=4):
    key = jax.random.PRNGKey(42)
    ks = jax.random.split(key, 16)
    cu = embed_dim // 8
    p = {
        'patch_W': 0.05 * jax.random.normal(ks[0], (c_in * patch * patch, embed_dim)),
        'patch_b': 0.01 * jax.random.normal(ks[1], (embed_dim,)),
        'pe_gaussian': jax.random.normal(ks[2], (2, embed_dim // 2)),
        'point_pos': 0.1 * jax.random.normal(ks[3], (embed_dim,)),
        'point_neg': 0.1 * jax.random.normal(ks[4], (embed_dim,)),
        'no_mask': 0.1 * jax.random.normal(ks[5], (embed_dim,)),
        'iou_token': 0.1 * jax.random.normal(ks[6], (embed_dim,)),
        'mask_tokens': 0.1 * jax.random.normal(ks[7], (num_mask_tokens, embed_dim)),
        'Wq': 0.1 * jax.random.normal(ks[8], (embed_dim, embed_dim)),
        'Wk': 0.1 * jax.random.normal(ks[9], (embed_dim, embed_dim)),
        'Wv': 0.1 * jax.random.normal(ks[10], (embed_dim, embed_dim)),
        'Wo': 0.1 * jax.random.normal(ks[11], (embed_dim, embed_dim)),
        'up_W': 0.1 * jax.random.normal(ks[12], (embed_dim, cu * 16)),
        'up_b': jnp.zeros((cu * 16,)),
        'hyper_W': 0.1 * jax.random.normal(ks[13], (embed_dim, cu)),
        'hyper_b': jnp.zeros((cu,)),
        'iou_W': 0.1 * jax.random.normal(ks[14], (embed_dim, num_mask_tokens)),
        'iou_b': jnp.zeros((num_mask_tokens,)),
    }
    return {k: v.astype(jnp.float32) for k, v in p.items()}


# ----------------------------------------------------------------------------
# Static (shape-only) constants — computed ONCE, outside the jitted forward.
# ----------------------------------------------------------------------------
def _pe_encoding(coords01, gaussian):
    c = 2.0 * coords01 - 1.0
    proj = (2.0 * math.pi) * (c @ gaussian)
    return jnp.concatenate([jnp.sin(proj), jnp.cos(proj)], axis=-1)


def dense_pe(h, w, gaussian):
    y = (jnp.arange(h, dtype=jnp.float32) + 0.5) / h
    x = (jnp.arange(w, dtype=jnp.float32) + 0.5) / w
    yy, xx = jnp.meshgrid(y, x, indexing='ij')
    coords = jnp.stack([xx, yy], axis=-1)          # (h, w, 2)
    return _pe_encoding(coords, gaussian).reshape(h * w, -1)   # (S, C)


def bilinear_matrix(n_out, n_in):
    # align_corners=False (half-pixel centers), matching F.interpolate.
    i = jnp.arange(n_out, dtype=jnp.float32)
    s = jnp.maximum((i + 0.5) * (n_in / n_out) - 0.5, 0.0)
    i0 = jnp.minimum(jnp.floor(s).astype(jnp.int32), n_in - 1)
    i1 = jnp.minimum(i0 + 1, n_in - 1)
    w1 = s - i0.astype(jnp.float32)
    w0 = 1.0 - w1
    return (jax.nn.one_hot(i0, n_in) * w0[:, None]
            + jax.nn.one_hot(i1, n_in) * w1[:, None])   # (n_out, n_in)


def resize_shuffle_matrix(H, W, he, we):
    """K[p*S + s, h*W + w] = Rw[h, 4*(s//we)+p//4] * Cw[w, 4*(s%we)+p%4].

    Folds the 4x pixel-shuffle permutation and the bilinear resize into one
    (16*S, H*W) matrix so the kernel produces the masks with one matmul.
    """
    Hl, Wl = 4 * he, 4 * we
    Rw = bilinear_matrix(H, Hl)                         # (H, Hl)
    Cw = bilinear_matrix(W, Wl)                         # (W, Wl)
    S = he * we
    p = jnp.arange(16)
    s = jnp.arange(S)
    y = 4 * (s[None, :] // we) + p[:, None] // 4        # (16, S)
    x = 4 * (s[None, :] % we) + p[:, None] % 4          # (16, S)
    Ry = Rw[:, y.reshape(-1)]                           # (H, 16*S)
    Cx = Cw[:, x.reshape(-1)]                           # (W, 16*S)
    K = jnp.einsum('hj,wj->jhw', Ry, Cx)                # (16*S, H, W)
    return K.reshape(16 * S, H * W).astype(jnp.float32)


def build_static(params, H, W, patch=8):
    """Derived constants / fused+bf16 weights. Depends only on static shapes."""
    he, we = H // patch, W // patch
    C = params['patch_W'].shape[1]
    M = params['mask_tokens'].shape[0]
    Mo = M - 1
    HW = H * W
    f32, bf16 = jnp.float32, jnp.bfloat16

    image_pe = dense_pe(he, we, params['pe_gaussian'])                     # (S, C)
    iou_w_pad = jnp.zeros((C, HW), f32).at[:, :Mo].set(params['iou_W'][:, 1:])
    iou_b_pad = jnp.zeros((1, HW), f32).at[0, :Mo].set(params['iou_b'][1:])
    return {
        'src_bias': (params['patch_b'] + params['no_mask']).reshape(1, C).astype(f32),
        'pe_k': (image_pe @ params['Wk']).astype(f32),                    # (S, C)
        'patch_w': params['patch_W'].astype(bf16),
        'w_q': (params['Wq'] / math.sqrt(C)).astype(bf16),
        'w_kv': jnp.concatenate([params['Wk'], params['Wv']], axis=1).astype(bf16),
        'w_o': params['Wo'].astype(bf16),
        'up_w': params['up_W'].astype(bf16),
        'up_b': params['up_b'].reshape(1, -1).astype(f32),
        'hyp_w': params['hyper_W'].astype(bf16),
        'hyp_b': params['hyper_b'].reshape(1, -1).astype(f32),
        'iou_w_pad': iou_w_pad.astype(bf16),
        'iou_b_pad': iou_b_pad,
        'kmat': resize_shuffle_matrix(H, W, he, we).astype(bf16),         # (16*S, HW)
    }


# ----------------------------------------------------------------------------
# Forward pass (equivalent to FlowISAM.forward with use_cache=False)
# ----------------------------------------------------------------------------
@functools.partial(jax.jit, static_argnames=("patch",))
def flowisam_forward(params, consts, flow, point_coords, point_labels, *, patch=8):
    B, g, c, H, W = flow.shape
    he, we = H // patch, W // patch
    S = he * we
    HW = H * W
    C = consts['patch_w'].shape[1]
    Cin = consts['patch_w'].shape[0]
    Cu = consts['hyp_w'].shape[1]
    M = params['mask_tokens'].shape[0]
    Mo = M - 1

    # ---- flow_encoder prep: mean over groups commutes with the affine patch
    # embed, so fold it in front of the matmul (exact up to fp rounding).
    xp = flow.mean(axis=1).reshape(B, c, he, patch, we, patch)
    xp = xp.transpose(0, 2, 4, 1, 3, 5).reshape(B, S, Cin).astype(jnp.bfloat16)

    # ---- prompt_encoder (tiny, XLA glue)
    coords01 = (point_coords + 0.5) / jnp.array([W, H], jnp.float32)      # (B, N, 2)
    pt_pe = _pe_encoding(coords01, params['pe_gaussian'])                 # (B, N, C)
    lbl = point_labels[..., None].astype(jnp.float32)
    sparse = pt_pe + lbl * params['point_pos'] + (1.0 - lbl) * params['point_neg']

    # ---- decoder tokens: [iou | mask tokens | sparse prompts], padded to 8 rows
    iou_tok = jnp.broadcast_to(params['iou_token'][None, None, :], (B, 1, C))
    mask_tok = jnp.broadcast_to(params['mask_tokens'][None], (B, M, C))
    tokens = jnp.concatenate([iou_tok, mask_tok, sparse], axis=1)         # (B, T, C)
    T = tokens.shape[1]
    Tp = ((T + 7) // 8) * 8
    if Tp != T:
        tokens = jnp.concatenate(
            [tokens, jnp.zeros((B, Tp - T, C), tokens.dtype)], axis=1)
    tokens = tokens.astype(jnp.float32)

    shared = lambda shape: pl.BlockSpec(shape, lambda b, _n=len(shape): (0,) * _n)
    in_specs = [
        pl.BlockSpec((1, S, Cin), lambda b: (b, 0, 0)),   # xp (per batch)
        pl.BlockSpec((1, Tp, C), lambda b: (b, 0, 0)),    # tokens (per batch)
        shared((1, C)),                                   # src bias
        shared((S, C)),                                   # image_pe @ Wk
        shared((Cin, C)),                                 # patch embed W
        shared((C, C)),                                   # Wq (scaled)
        shared((C, 2 * C)),                               # [Wk | Wv]
        shared((C, C)),                                   # Wo
        shared((C, 16 * Cu)), shared((1, 16 * Cu)),       # up projection
        shared((C, Cu)), shared((1, Cu)),                 # hyper head
        shared((C, HW)), shared((1, HW)),                 # IoU head (HW-padded)
        shared((16 * S, HW)),                             # fused resize matrix
    ]
    out_specs = pl.BlockSpec((1, Mo + 1, HW), lambda b: (b, 0, 0))

    out = pl.pallas_call(
        _fused_flowisam_kernel,
        grid=(B,),
        in_specs=in_specs,
        out_specs=out_specs,
        out_shape=jax.ShapeDtypeStruct((B, Mo + 1, HW), jnp.float32),
        compiler_params=pltpu.CompilerParams(
            dimension_semantics=("parallel",)),
    )(
        xp,
        tokens,
        consts['src_bias'],
        consts['pe_k'],
        consts['patch_w'],
        consts['w_q'],
        consts['w_kv'],
        consts['w_o'],
        consts['up_w'], consts['up_b'],
        consts['hyp_w'], consts['hyp_b'],
        consts['iou_w_pad'], consts['iou_b_pad'],
        consts['kmat'],
    )

    # multimask_output=True: only the 3 surviving mask tokens were computed.
    ori_res_masks = out[:, :Mo, :].reshape(B, Mo, H, W)                   # (B, 3, H, W)
    fiou_predictions = out[:, Mo, :Mo]                                    # (B, 3)
    return ori_res_masks, fiou_predictions


# ----------------------------------------------------------------------------
if __name__ == "__main__":
    key = jax.random.PRNGKey(0)
    k1, k2 = jax.random.split(key)

    B, g, c, H, W = 2, 3, 2, 32, 32          # flow: (B, groups, uv, H, W)
    N_pts = 2

    flow = jax.random.normal(k1, (B, g, c, H, W), jnp.float32)
    point_coords = jax.random.uniform(k2, (B, N_pts, 2), jnp.float32,
                                      minval=0.0, maxval=float(W))
    point_labels = jnp.tile(jnp.array([[1.0, 0.0]], jnp.float32), (B, 1))

    params = init_params(c_in=c, patch=8, embed_dim=32, num_mask_tokens=4)
    consts = build_static(params, H, W, patch=8)   # hoisted out of the jit

    ori_res_masks, fiou_predictions = flowisam_forward(
        params, consts, flow, point_coords, point_labels, patch=8)
    jax.block_until_ready((ori_res_masks, fiou_predictions))

    assert ori_res_masks.shape == (B, 3, H, W)
    assert fiou_predictions.shape == (B, 3)
    print("KERNEL_OK")
</pallas_src>

<mosaic_0001>
module attributes {stable_mosaic.version = 11 : i64} {
  func.func @_fused_flowisam_kernel(%arg0: i32, %arg1: memref<1x16x128xbf16, #tpu.memory_space<vmem>>, %arg2: memref<1x8x32xf32, #tpu.memory_space<vmem>>, %arg3: memref<1x32xf32, #tpu.memory_space<vmem>>, %arg4: memref<16x32xf32, #tpu.memory_space<vmem>>, %arg5: memref<128x32xbf16, #tpu.memory_space<vmem>>, %arg6: memref<32x32xbf16, #tpu.memory_space<vmem>>, %arg7: memref<32x64xbf16, #tpu.memory_space<vmem>>, %arg8: memref<32x32xbf16, #tpu.memory_space<vmem>>, %arg9: memref<32x64xbf16, #tpu.memory_space<vmem>>, %arg10: memref<1x64xf32, #tpu.memory_space<vmem>>, %arg11: memref<32x4xbf16, #tpu.memory_space<vmem>>, %arg12: memref<1x4xf32, #tpu.memory_space<vmem>>, %arg13: memref<32x1024xbf16, #tpu.memory_space<vmem>>, %arg14: memref<1x1024xf32, #tpu.memory_space<vmem>>, %arg15: memref<256x1024xbf16, #tpu.memory_space<vmem>>, %arg16: memref<1x4x1024xf32, #tpu.memory_space<vmem>>) attributes {dimension_semantics = [#tpu.dimension_semantics<parallel>], iteration_bounds = array<i64: 2>, scalar_prefetch = 0 : i64, scratch_operands = 0 : i64, tpu.core_type = #tpu.core_type<tc>, window_params = [{transform_indices = @transform_0, window_bounds = array<i64: 1, 16, 128>}, {transform_indices = @transform_1, window_bounds = array<i64: 1, 8, 32>}, {pipeline_mode = #tpu.pipeline_mode<synchronous>, transform_indices = @transform_2, window_bounds = array<i64: 1, 32>}, {pipeline_mode = #tpu.pipeline_mode<synchronous>, transform_indices = @transform_3, window_bounds = array<i64: 16, 32>}, {pipeline_mode = #tpu.pipeline_mode<synchronous>, transform_indices = @transform_4, window_bounds = array<i64: 128, 32>}, {pipeline_mode = #tpu.pipeline_mode<synchronous>, transform_indices = @transform_5, window_bounds = array<i64: 32, 32>}, {pipeline_mode = #tpu.pipeline_mode<synchronous>, transform_indices = @transform_6, window_bounds = array<i64: 32, 64>}, {pipeline_mode = #tpu.pipeline_mode<synchronous>, transform_indices = @transform_7, window_bounds = array<i64: 32, 32>}, {pipeline_mode = #tpu.pipeline_mode<synchronous>, transform_indices = @transform_8, window_bounds = array<i64: 32, 64>}, {pipeline_mode = #tpu.pipeline_mode<synchronous>, transform_indices = @transform_9, window_bounds = array<i64: 1, 64>}, {pipeline_mode = #tpu.pipeline_mode<synchronous>, transform_indices = @transform_10, window_bounds = array<i64: 32, 4>}, {pipeline_mode = #tpu.pipeline_mode<synchronous>, transform_indices = @transform_11, window_bounds = array<i64: 1, 4>}, {pipeline_mode = #tpu.pipeline_mode<synchronous>, transform_indices = @transform_12, window_bounds = array<i64: 32, 1024>}, {pipeline_mode = #tpu.pipeline_mode<synchronous>, transform_indices = @transform_13, window_bounds = array<i64: 1, 1024>}, {pipeline_mode = #tpu.pipeline_mode<synchronous>, transform_indices = @transform_14, window_bounds = array<i64: 256, 1024>}, {transform_indices = @transform_15, window_bounds = array<i64: 1, 4, 1024>}]} {
    %c0 = arith.constant 0 : index
    %c0_0 = arith.constant 0 : index
    %c0_1 = arith.constant 0 : index
    %0 = vector.load %arg1[%c0, %c0_0, %c0_1] : memref<1x16x128xbf16, #tpu.memory_space<vmem>>, vector<1x16x128xbf16>
    %1 = vector.shape_cast %0 : vector<1x16x128xbf16> to vector<16x128xbf16>
    %c0_2 = arith.constant 0 : index
    %c0_3 = arith.constant 0 : index
    %c0_4 = arith.constant 0 : index
    %2 = vector.load %arg2[%c0_2, %c0_3, %c0_4] : memref<1x8x32xf32, #tpu.memory_space<vmem>>, vector<1x8x32xf32>
    %3 = vector.shape_cast %2 : vector<1x8x32xf32> to vector<8x32xf32>
    %c0_5 = arith.constant 0 : index
    %c0_6 = arith.constant 0 : index
    %4 = vector.load %arg5[%c0_5, %c0_6] : memref<128x32xbf16, #tpu.memory_space<vmem>>, vector<128x32xbf16>
    %cst = arith.constant dense<0.000000e+00> : vector<16x32xf32>
    %5 = tpu.matmul %1, %4, %cst {dimension_numbers = #tpu.dot_dimension_numbers<[1], [0], [0], [1], [0, 0, 1, 1], [], []>} : vector<16x128xbf16>, vector<128x32xbf16>, vector<16x32xf32> -> vector<16x32xf32>
    %c0_7 = arith.constant 0 : index
    %c0_8 = arith.constant 0 : index
    %6 = vector.load %arg3[%c0_7, %c0_8] : memref<1x32xf32, #tpu.memory_space<vmem>>, vector<1x32xf32>
    %7 = vector.broadcast %6 : vector<1x32xf32> to vector<16x32xf32>
    %8 = arith.addf %5, %7 : vector<16x32xf32>
    %9 = arith.truncf %8 : vector<16x32xf32> to vector<16x32xbf16>
    %10 = arith.truncf %3 : vector<8x32xf32> to vector<8x32xbf16>
    %c0_9 = arith.constant 0 : index
    %c0_10 = arith.constant 0 : index
    %11 = vector.load %arg6[%c0_9, %c0_10] : memref<32x32xbf16, #tpu.memory_space<vmem>>, vector<32x32xbf16>
    %cst_11 = arith.constant dense<0.000000e+00> : vector<8x32xf32>
    %12 = tpu.matmul %10, %11, %cst_11 {dimension_numbers = #tpu.dot_dimension_numbers<[1], [0], [0], [1], [0, 0, 1, 1], [], []>} : vector<8x32xbf16>, vector<32x32xbf16>, vector<8x32xf32> -> vector<8x32xf32>
    %c0_12 = arith.constant 0 : index
    %c0_13 = arith.constant 0 : index
    %13 = vector.load %arg7[%c0_12, %c0_13] : memref<32x64xbf16, #tpu.memory_space<vmem>>, vector<32x64xbf16>
    %cst_14 = arith.constant dense<0.000000e+00> : vector<16x64xf32>
    %14 = tpu.matmul %9, %13, %cst_14 {dimension_numbers = #tpu.dot_dimension_numbers<[1], [0], [0], [1], [0, 0, 1, 1], [], []>} : vector<16x32xbf16>, vector<32x64xbf16>, vector<16x64xf32> -> vector<16x64xf32>
    %15 = vector.extract_strided_slice %14 {offsets = [0, 0], sizes = [16, 32], strides = [1, 1]} : vector<16x64xf32> to vector<16x32xf32>
    %c0_15 = arith.constant 0 : index
    %c0_16 = arith.constant 0 : index
    %16 = vector.load %arg4[%c0_15, %c0_16] : memref<16x32xf32, #tpu.memory_space<vmem>>, vector<16x32xf32>
    %17 = arith.addf %15, %16 : vector<16x32xf32>
    %18 = vector.extract_strided_slice %14 {offsets = [0, 32], sizes = [16, 32], strides = [1, 1]} : vector<16x64xf32> to vector<16x32xf32>
    "tpu.trace_start"() <{level = 10 : i32, message = "td,sd->ts"}> : () -> ()
    %cst_17 = arith.constant dense<0.000000e+00> : vector<8x16xf32>
    %19 = tpu.matmul %12, %17, %cst_17 {dimension_numbers = #tpu.dot_dimension_numbers<[1], [1], [0], [0], [0, 0, 1, 0], [], []>} : vector<8x32xf32>, vector<16x32xf32>, vector<8x16xf32> -> vector<8x16xf32>
    "tpu.trace_stop"() : () -> ()
    %cst_18 = arith.constant dense<0xFF800000> : vector<8xf32>
    %20 = vector.multi_reduction <maximumf>, %19, %cst_18 [1] : vector<8x16xf32> to vector<8xf32>
    %cst_19 = arith.constant 0xFF800000 : f32
    %21 = vector.broadcast %cst_19 : f32 to vector<8xf32>
    %22 = arith.maximumf %21, %20 : vector<8xf32>
    %23 = vector.shape_cast %22 : vector<8xf32> to vector<8x1xf32>
    %24 = vector.broadcast %23 : vector<8x1xf32> to vector<8x16xf32>
    %25 = arith.subf %19, %24 : vector<8x16xf32>
    %26 = math.exp %25 : vector<8x16xf32>
    %cst_20 = arith.constant dense<0.000000e+00> : vector<8xf32>
    %27 = vector.multi_reduction <add>, %26, %cst_20 [1] : vector<8x16xf32> to vector<8xf32>
    %28 = vector.shape_cast %27 : vector<8xf32> to vector<8x1xf32>
    %29 = vector.broadcast %28 : vector<8x1xf32> to vector<8x16xf32>
    %30 = arith.divf %26, %29 : vector<8x16xf32>
    %31 = arith.truncf %30 : vector<8x16xf32> to vector<8x16xbf16>
    %32 = arith.truncf %18 : vector<16x32xf32> to vector<16x32xbf16>
    %cst_21 = arith.constant dense<0.000000e+00> : vector<8x32xf32>
    %33 = tpu.matmul %31, %32, %cst_21 {dimension_numbers = #tpu.dot_dimension_numbers<[1], [0], [0], [1], [0, 0, 1, 1], [], []>} : vector<8x16xbf16>, vector<16x32xbf16>, vector<8x32xf32> -> vector<8x32xf32>
    %34 = arith.truncf %33 : vector<8x32xf32> to vector<8x32xbf16>
    %c0_22 = arith.constant 0 : index
    %c0_23 = arith.constant 0 : index
    %35 = vector.load %arg8[%c0_22, %c0_23] : memref<32x32xbf16, #tpu.memory_space<vmem>>, vector<32x32xbf16>
    %cst_24 = arith.constant dense<0.000000e+00> : vector<8x32xf32>
    %36 = tpu.matmul %34, %35, %cst_24 {dimension_numbers = #tpu.dot_dimension_numbers<[1], [0], [0], [1], [0, 0, 1, 1], [], []>} : vector<8x32xbf16>, vector<32x32xbf16>, vector<8x32xf32> -> vector<8x32xf32>
    %37 = arith.addf %3, %36 : vector<8x32xf32>
    %38 = vector.extract_strided_slice %37 {offsets = [0, 0], sizes = [1, 32], strides = [1, 1]} : vector<8x32xf32> to vector<1x32xf32>
    %39 = arith.truncf %38 : vector<1x32xf32> to vector<1x32xbf16>
    %c0_25 = arith.constant 0 : index
    %c0_26 = arith.constant 0 : index
    %40 = vector.load %arg13[%c0_25, %c0_26] : memref<32x1024xbf16, #tpu.memory_space<vmem>>, vector<32x1024xbf16>
    %cst_27 = arith.constant dense<0.000000e+00> : vector<1x1024xf32>
    %41 = tpu.matmul %39, %40, %cst_27 {dimension_numbers = #tpu.dot_dimension_numbers<[1], [0], [0], [1], [0, 0, 1, 1], [], []>} : vector<1x32xbf16>, vector<32x1024xbf16>, vector<1x1024xf32> -> vector<1x1024xf32>
    %c0_28 = arith.constant 0 : index
    %c0_29 = arith.constant 0 : index
    %42 = vector.load %arg14[%c0_28, %c0_29] : memref<1x1024xf32, #tpu.memory_space<vmem>>, vector<1x1024xf32>
    %43 = arith.addf %41, %42 : vector<1x1024xf32>
    %c0_30 = arith.constant 0 : index
    %c0_31 = arith.constant 0 : index
    %44 = vector.load %arg9[%c0_30, %c0_31] : memref<32x64xbf16, #tpu.memory_space<vmem>>, vector<32x64xbf16>
    %cst_32 = arith.constant dense<0.000000e+00> : vector<16x64xf32>
    %45 = tpu.matmul %9, %44, %cst_32 {dimension_numbers = #tpu.dot_dimension_numbers<[1], [0], [0], [1], [0, 0, 1, 1], [], []>} : vector<16x32xbf16>, vector<32x64xbf16>, vector<16x64xf32> -> vector<16x64xf32>
    %c0_33 = arith.constant 0 : index
    %c0_34 = arith.constant 0 : index
    %46 = vector.load %arg10[%c0_33, %c0_34] : memref<1x64xf32, #tpu.memory_space<vmem>>, vector<1x64xf32>
    %47 = vector.broadcast %46 : vector<1x64xf32> to vector<16x64xf32>
    %48 = arith.addf %45, %47 : vector<16x64xf32>
    %49 = arith.mulf %48, %48 : vector<16x64xf32>
    %50 = arith.mulf %48, %49 : vector<16x64xf32>
    %cst_35 = arith.constant 4.471500e-02 : f32
    %51 = vector.broadcast %cst_35 : f32 to vector<16x64xf32>
    %52 = arith.mulf %51, %50 : vector<16x64xf32>
    %53 = arith.addf %48, %52 : vector<16x64xf32>
    %cst_36 = arith.constant 0.797884583 : f32
    %54 = vector.broadcast %cst_36 : f32 to vector<16x64xf32>
    %55 = arith.mulf %54, %53 : vector<16x64xf32>
    %56 = math.tanh %55 : vector<16x64xf32>
    %cst_37 = arith.constant 1.000000e+00 : f32
    %57 = vector.broadcast %cst_37 : f32 to vector<16x64xf32>
    %58 = arith.addf %57, %56 : vector<16x64xf32>
    %cst_38 = arith.constant 5.000000e-01 : f32
    %59 = vector.broadcast %cst_38 : f32 to vector<16x64xf32>
    %60 = arith.mulf %59, %58 : vector<16x64xf32>
    %61 = arith.mulf %48, %60 : vector<16x64xf32>
    %62 = vector.extract_strided_slice %37 {offsets = [2, 0], sizes = [3, 32], strides = [1, 1]} : vector<8x32xf32> to vector<3x32xf32>
    %63 = arith.truncf %62 : vector<3x32xf32> to vector<3x32xbf16>
    %c0_39 = arith.constant 0 : index
    %c0_40 = arith.constant 0 : index
    %64 = vector.load %arg11[%c0_39, %c0_40] : memref<32x4xbf16, #tpu.memory_space<vmem>>, vector<32x4xbf16>
    %cst_41 = arith.constant dense<0.000000e+00> : vector<3x4xf32>
    %65 = tpu.matmul %63, %64, %cst_41 {dimension_numbers = #tpu.dot_dimension_numbers<[1], [0], [0], [1], [0, 0, 1, 1], [], []>} : vector<3x32xbf16>, vector<32x4xbf16>, vector<3x4xf32> -> vector<3x4xf32>
    %c0_42 = arith.constant 0 : index
    %c0_43 = arith.constant 0 : index
    %66 = vector.load %arg12[%c0_42, %c0_43] : memref<1x4xf32, #tpu.memory_space<vmem>>, vector<1x4xf32>
    %67 = vector.broadcast %66 : vector<1x4xf32> to vector<3x4xf32>
    %68 = arith.addf %65, %67 : vector<3x4xf32>
    %69 = vector.extract_strided_slice %61 {offsets = [0, 0], sizes = [16, 4], strides = [1, 1]} : vector<16x64xf32> to vector<16x4xf32>
    %70 = vector.extract_strided_slice %61 {offsets = [0, 4], sizes = [16, 4], strides = [1, 1]} : vector<16x64xf32> to vector<16x4xf32>
    %71 = vector.extract_strided_slice %61 {offsets = [0, 8], sizes = [16, 4], strides = [1, 1]} : vector<16x64xf32> to vector<16x4xf32>
    %72 = vector.extract_strided_slice %61 {offsets = [0, 12], sizes = [16, 4], strides = [1, 1]} : vector<16x64xf32> to vector<16x4xf32>
    %73 = vector.extract_strided_slice %61 {offsets = [0, 16], sizes = [16, 4], strides = [1, 1]} : vector<16x64xf32> to vector<16x4xf32>
    %74 = vector.extract_strided_slice %61 {offsets = [0, 20], sizes = [16, 4], strides = [1, 1]} : vector<16x64xf32> to vector<16x4xf32>
    %75 = vector.extract_strided_slice %61 {offsets = [0, 24], sizes = [16, 4], strides = [1, 1]} : vector<16x64xf32> to vector<16x4xf32>
    %76 = vector.extract_strided_slice %61 {offsets = [0, 28], sizes = [16, 4], strides = [1, 1]} : vector<16x64xf32> to vector<16x4xf32>
    %77 = vector.extract_strided_slice %61 {offsets = [0, 32], sizes = [16, 4], strides = [1, 1]} : vector<16x64xf32> to vector<16x4xf32>
    %78 = vector.extract_strided_slice %61 {offsets = [0, 36], sizes = [16, 4], strides = [1, 1]} : vector<16x64xf32> to vector<16x4xf32>
    %79 = vector.extract_strided_slice %61 {offsets = [0, 40], sizes = [16, 4], strides = [1, 1]} : vector<16x64xf32> to vector<16x4xf32>
    %80 = vector.extract_strided_slice %61 {offsets = [0, 44], sizes = [16, 4], strides = [1, 1]} : vector<16x64xf32> to vector<16x4xf32>
    %81 = vector.extract_strided_slice %61 {offsets = [0, 48], sizes = [16, 4], strides = [1, 1]} : vector<16x64xf32> to vector<16x4xf32>
    %82 = vector.extract_strided_slice %61 {offsets = [0, 52], sizes = [16, 4], strides = [1, 1]} : vector<16x64xf32> to vector<16x4xf32>
    %83 = vector.extract_strided_slice %61 {offsets = [0, 56], sizes = [16, 4], strides = [1, 1]} : vector<16x64xf32> to vector<16x4xf32>
    %84 = vector.extract_strided_slice %61 {offsets = [0, 60], sizes = [16, 4], strides = [1, 1]} : vector<16x64xf32> to vector<16x4xf32>
    %85 = tpu.concatenate %69, %70, %71, %72, %73, %74, %75, %76, %77, %78, %79, %80, %81, %82, %83, %84 in 0 : vector<16x4xf32>, vector<16x4xf32>, vector<16x4xf32>, vector<16x4xf32>, vector<16x4xf32>, vector<16x4xf32>, vector<16x4xf32>, vector<16x4xf32>, vector<16x4xf32>, vector<16x4xf32>, vector<16x4xf32>, vector<16x4xf32>, vector<16x4xf32>, vector<16x4xf32>, vector<16x4xf32>, vector<16x4xf32> -> vector<256x4xf32>
    "tpu.trace_start"() <{level = 10 : i32, message = "mc,kc->mk"}> : () -> ()
    %cst_44 = arith.constant dense<0.000000e+00> : vector<3x256xf32>
    %86 = tpu.matmul %68, %85, %cst_44 {dimension_numbers = #tpu.dot_dimension_numbers<[1], [1], [0], [0], [0, 0, 1, 0], [], []>} : vector<3x4xf32>, vector<256x4xf32>, vector<3x256xf32> -> vector<3x256xf32>
    "tpu.trace_stop"() : () -> ()
    %87 = arith.truncf %86 : vector<3x256xf32> to vector<3x256xbf16>
    %c0_45 = arith.constant 0 : index
    %c0_46 = arith.constant 0 : index
    %88 = vector.load %arg15[%c0_45, %c0_46] : memref<256x1024xbf16, #tpu.memory_space<vmem>>, vector<256x1024xbf16>
    %cst_47 = arith.constant dense<0.000000e+00> : vector<3x1024xf32>
    %89 = tpu.matmul %87, %88, %cst_47 {dimension_numbers = #tpu.dot_dimension_numbers<[1], [0], [0], [1], [0, 0, 1, 1], [], []>} : vector<3x256xbf16>, vector<256x1024xbf16>, vector<3x1024xf32> -> vector<3x1024xf32>
    %c0_48 = arith.constant 0 : index
    %c0_49 = arith.constant 0 : index
    %c0_50 = arith.constant 0 : index
    %90 = vector.load %arg16[%c0_48, %c0_49, %c0_50] : memref<1x4x1024xf32, #tpu.memory_space<vmem>>, vector<1x3x1024xf32>
    %91 = vector.shape_cast %90 : vector<1x3x1024xf32> to vector<3x1024xf32>
    %92 = vector.shape_cast %89 : vector<3x1024xf32> to vector<1x3x1024xf32>
    tpu.vector_store %arg16[%c0_48, %c0_49, %c0_50], %92 {strides = array<i32>} : memref<1x4x1024xf32, #tpu.memory_space<vmem>>, vector<1x3x1024xf32>,
    %c0_51 = arith.constant 0 : index
    %c3 = arith.constant 3 : index
    %c0_52 = arith.constant 0 : index
    %93 = vector.load %arg16[%c0_51, %c3, %c0_52] : memref<1x4x1024xf32, #tpu.memory_space<vmem>>, vector<1x1x1024xf32>
    %94 = vector.shape_cast %93 : vector<1x1x1024xf32> to vector<1x1024xf32>
    %95 = vector.shape_cast %43 : vector<1x1024xf32> to vector<1x1x1024xf32>
    tpu.vector_store %arg16[%c0_51, %c3, %c0_52], %95 {strides = array<i32>} : memref<1x4x1024xf32, #tpu.memory_space<vmem>>, vector<1x1x1024xf32>,
    return
  }
  func.func @transform_0(%arg0: i32) -> (i32, i32, i32) {
    %c0_i32 = arith.constant 0 : i32
    %c0_i32_0 = arith.constant 0 : i32
    %c0_i32_1 = arith.constant 0 : i32
    return %arg0, %c0_i32, %c0_i32_0 : i32, i32, i32
  }
  func.func @transform_1(%arg0: i32) -> (i32, i32, i32) {
    %c0_i32 = arith.constant 0 : i32
    %c0_i32_0 = arith.constant 0 : i32
    %c0_i32_1 = arith.constant 0 : i32
    return %arg0, %c0_i32, %c0_i32_0 : i32, i32, i32
  }
  func.func @transform_2(%arg0: i32) -> (i32, i32) {
    %c0_i32 = arith.constant 0 : i32
    %c0_i32_0 = arith.constant 0 : i32
    %c0_i32_1 = arith.constant 0 : i32
    return %c0_i32, %c0_i32_0 : i32, i32
  }
  func.func @transform_3(%arg0: i32) -> (i32, i32) {
    %c0_i32 = arith.constant 0 : i32
    %c0_i32_0 = arith.constant 0 : i32
    %c0_i32_1 = arith.constant 0 : i32
    return %c0_i32, %c0_i32_0 : i32, i32
  }
  func.func @transform_4(%arg0: i32) -> (i32, i32) {
    %c0_i32 = arith.constant 0 : i32
    %c0_i32_0 = arith.constant 0 : i32
    %c0_i32_1 = arith.constant 0 : i32
    return %c0_i32, %c0_i32_0 : i32, i32
  }
  func.func @transform_5(%arg0: i32) -> (i32, i32) {
    %c0_i32 = arith.constant 0 : i32
    %c0_i32_0 = arith.constant 0 : i32
    %c0_i32_1 = arith.constant 0 : i32
    return %c0_i32, %c0_i32_0 : i32, i32
  }
  func.func @transform_6(%arg0: i32) -> (i32, i32) {
    %c0_i32 = arith.constant 0 : i32
    %c0_i32_0 = arith.constant 0 : i32
    %c0_i32_1 = arith.constant 0 : i32
    return %c0_i32, %c0_i32_0 : i32, i32
  }
  func.func @transform_7(%arg0: i32) -> (i32, i32) {
    %c0_i32 = arith.constant 0 : i32
    %c0_i32_0 = arith.constant 0 : i32
    %c0_i32_1 = arith.constant 0 : i32
    return %c0_i32, %c0_i32_0 : i32, i32
  }
  func.func @transform_8(%arg0: i32) -> (i32, i32) {
    %c0_i32 = arith.constant 0 : i32
    %c0_i32_0 = arith.constant 0 : i32
    %c0_i32_1 = arith.constant 0 : i32
    return %c0_i32, %c0_i32_0 : i32, i32
  }
  func.func @transform_9(%arg0: i32) -> (i32, i32) {
    %c0_i32 = arith.constant 0 : i32
    %c0_i32_0 = arith.constant 0 : i32
    %c0_i32_1 = arith.constant 0 : i32
    return %c0_i32, %c0_i32_0 : i32, i32
  }
  func.func @transform_10(%arg0: i32) -> (i32, i32) {
    %c0_i32 = arith.constant 0 : i32
    %c0_i32_0 = arith.constant 0 : i32
    %c0_i32_1 = arith.constant 0 : i32
    return %c0_i32, %c0_i32_0 : i32, i32
  }
  func.func @transform_11(%arg0: i32) -> (i32, i32) {
    %c0_i32 = arith.constant 0 : i32
    %c0_i32_0 = arith.constant 0 : i32
    %c0_i32_1 = arith.constant 0 : i32
    return %c0_i32, %c0_i32_0 : i32, i32
  }
  func.func @transform_12(%arg0: i32) -> (i32, i32) {
    %c0_i32 = arith.constant 0 : i32
    %c0_i32_0 = arith.constant 0 : i32
    %c0_i32_1 = arith.constant 0 : i32
    return %c0_i32, %c0_i32_0 : i32, i32
  }
  func.func @transform_13(%arg0: i32) -> (i32, i32) {
    %c0_i32 = arith.constant 0 : i32
    %c0_i32_0 = arith.constant 0 : i32
    %c0_i32_1 = arith.constant 0 : i32
    return %c0_i32, %c0_i32_0 : i32, i32
  }
  func.func @transform_14(%arg0: i32) -> (i32, i32) {
    %c0_i32 = arith.constant 0 : i32
    %c0_i32_0 = arith.constant 0 : i32
    %c0_i32_1 = arith.constant 0 : i32
    return %c0_i32, %c0_i32_0 : i32, i32
  }
  func.func @transform_15(%arg0: i32) -> (i32, i32, i32) {
    %c0_i32 = arith.constant 0 : i32
    %c0_i32_0 = arith.constant 0 : i32
    %c0_i32_1 = arith.constant 0 : i32
    return %arg0, %c0_i32, %c0_i32_0 : i32, i32, i32
  }
}

</mosaic_0001>

<llo_original>
// kernel: flowisam_forward.1
$region0: #{flowisam_forward.1}
  #allocation0 [shape = 'u32[]', space=smem, size = 0x4, offset = 0x4, fixed_abs, tag = 'smem constant byte address 0x4 - core index']
  #allocation1 [shape = 'u32[144,128]{1,0:T(1,128)}', space=vmem, size = 0x12000, scoped, tag = 'internal scratch']
  %s0 = inlined_call_operand.vmem [shape: bf16[2,16,128], index: 0, kind: input, shape index: {}]
  %s1 = inlined_call_operand.vmem [shape: f32[2,8,32], index: 1, kind: input, shape index: {}]
  %s2 = inlined_call_operand.vmem [shape: f32[1,32], index: 2, kind: input, shape index: {}]
  %s3 = inlined_call_operand.vmem [shape: f32[16,32], index: 3, kind: input, shape index: {}]
  %s4 = inlined_call_operand.vmem [shape: bf16[128,32], index: 4, kind: input, shape index: {}]
  %s5 = inlined_call_operand.vmem [shape: bf16[32,32], index: 5, kind: input, shape index: {}]
  %s6 = inlined_call_operand.vmem [shape: bf16[32,64], index: 6, kind: input, shape index: {}]
  %s7 = inlined_call_operand.vmem [shape: bf16[32,32], index: 7, kind: input, shape index: {}]
  %s8 = inlined_call_operand.vmem [shape: bf16[32,64], index: 8, kind: input, shape index: {}]
  %s9 = inlined_call_operand.vmem [shape: f32[1,64], index: 9, kind: input, shape index: {}]
  %s10 = inlined_call_operand.vmem [shape: bf16[32,4], index: 10, kind: input, shape index: {}]
  %s11 = inlined_call_operand.vmem [shape: f32[1,4], index: 11, kind: input, shape index: {}]
  %s12 = inlined_call_operand.vmem [shape: bf16[32,1024], index: 12, kind: input, shape index: {}]
  %s13 = inlined_call_operand.vmem [shape: f32[1,1024], index: 13, kind: input, shape index: {}]
  %s14 = inlined_call_operand.vmem [shape: bf16[256,1024], index: 14, kind: input, shape index: {}]
  %s15 = inlined_call_operand.vmem [shape: f32[2,4,1024], index: 15, kind: output, shape index: {}]
  %s16 = sld [smem:[#allocation0]]
  $region93: #{flowisam_forward.1} parent=0
    _
  %s18 = ssub.s32 1, %s16
  %s19 = scalar_select 0, %s18, %s16
  loop: start=0, step=1, limit=4
  $region2: #{flowisam_forward.1} parent=0 // loop_pre_header
    _
  $region3: #{flowisam_forward.1} parent=0 // loop_header
    %s21 = sphi 0, %s25
    %p22 = scmp.ge.s32.totalorder %s21, 4
    %s31 = sphi 0, %s33
    %s34 = sphi 0, %s31
    %s35 = sphi 0, %s34
    %s51 = sphi 0, %s35
    %s57 = sphi 0, %s59
    %s60 = sphi 0, %s57
    %s61 = sphi 0, %s60
    %s77 = sphi 0, %s61
    %s81 = sphi 0, %s81
    %s83 = sphi 0, %s81
    %s84 = sphi 0, %s83
    %s98 = sphi 0, %s84
    %s102 = sphi 0, %s102
    %s104 = sphi 0, %s102
    %s105 = sphi 0, %s104
    %s119 = sphi 0, %s105
    %s123 = sphi 0, %s123
    %s125 = sphi 0, %s123
    %s126 = sphi 0, %s125
    %s140 = sphi 0, %s126
    %s144 = sphi 0, %s144
    %s146 = sphi 0, %s144
    %s147 = sphi 0, %s146
    %s161 = sphi 0, %s147
    %s165 = sphi 0, %s165
    %s167 = sphi 0, %s165
    %s168 = sphi 0, %s167
    %s182 = sphi 0, %s168
    %s186 = sphi 0, %s186
    %s188 = sphi 0, %s186
    %s189 = sphi 0, %s188
    %s203 = sphi 0, %s189
    %s207 = sphi 0, %s207
    %s209 = sphi 0, %s207
    %s210 = sphi 0, %s209
    %s224 = sphi 0, %s210
    %s228 = sphi 0, %s228
    %s230 = sphi 0, %s228
    %s231 = sphi 0, %s230
    %s245 = sphi 0, %s231
    %s249 = sphi 0, %s249
    %s251 = sphi 0, %s249
    %s252 = sphi 0, %s251
    %s266 = sphi 0, %s252
    %s270 = sphi 0, %s270
    %s272 = sphi 0, %s270
    %s273 = sphi 0, %s272
    %s287 = sphi 0, %s273
    %s291 = sphi 0, %s291
    %s293 = sphi 0, %s291
    %s294 = sphi 0, %s293
    %s308 = sphi 0, %s294
    %s312 = sphi 0, %s312
    %s314 = sphi 0, %s312
    %s315 = sphi 0, %s314
    %s329 = sphi 0, %s315
    %s333 = sphi 0, %s333
    %s335 = sphi 0, %s333
    %s336 = sphi 0, %s335
    %s350 = sphi 0, %s336
    %s356 = sphi 0, %s358
    %s359 = sphi 0, %s356
    %s360 = sphi 0, %s359
    %s376 = sphi 0, %s360
  $region4: #{flowisam_forward.1} parent=0 // loop_header_branch
    %24 = sbr.rel (%p22) target = $region8
  $region5: #{flowisam_forward.1} parent=0 // loop_body
    %s26 = ssub.s32 %s21, 1
    %s27 = ssub.s32 %s21, 2
    %s28 = sadd.s32 %s21, 1
    %s29 = ssub.s32 %s21, %s28
    %p30 = scmp.eq.s32.totalorder %s29, 0
    %s32 = sadd.s32 %s31, 1
    %s33 = scalar_select %p30, %s31, %s32
    %p36 = pneg %p30
    %p37 = scmp.eq.s32.totalorder %s21, 1
    %p38 = por %p36, %p37
    %p39 = scmp.ne.s32.totalorder %s31, %s34
    %p40 = scmp.eq.s32.totalorder %s21, 0
    %p41 = por %p39, %p40
    %p42 = scmp.ne.s32.totalorder %s31, %s34
    %p43 = scmp.eq.s32.totalorder %s26, 1
    %p44 = por %p42, %p43
    %p45 = scmp.ne.s32.totalorder %s34, %s35
    %p46 = scmp.eq.s32.totalorder %s26, 0
    %p47 = por %p45, %p46
    %p48 = scmp.ne.s32.totalorder %s34, %s35
    %p49 = scmp.eq.s32.totalorder %s27, 1
    %p50 = por %p48, %p49
    %p52 = scmp.ne.s32.totalorder %s35, %s51
    %p53 = scmp.eq.s32.totalorder %s27, 0
    %p54 = por %p52, %p53
    %s55 = ssub.s32 %s21, %s28
    %p56 = scmp.eq.s32.totalorder %s55, 0
    %s58 = sadd.s32 %s57, 1
    %s59 = scalar_select %p56, %s57, %s58
    %p62 = pneg %p56
    %p63 = scmp.eq.s32.totalorder %s21, 1
    %p64 = por %p62, %p63
    %p65 = scmp.ne.s32.totalorder %s57, %s60
    %p66 = scmp.eq.s32.totalorder %s21, 0
    %p67 = por %p65, %p66
    %p68 = scmp.ne.s32.totalorder %s57, %s60
    %p69 = scmp.eq.s32.totalorder %s26, 1
    %p70 = por %p68, %p69
    %p71 = scmp.ne.s32.totalorder %s60, %s61
    %p72 = scmp.eq.s32.totalorder %s26, 0
    %p73 = por %p71, %p72
    %p74 = scmp.ne.s32.totalorder %s60, %s61
    %p75 = scmp.eq.s32.totalorder %s27, 1
    %p76 = por %p74, %p75
    %p78 = scmp.ne.s32.totalorder %s61, %s77
    %p79 = scmp.eq.s32.totalorder %s27, 0
    %p80 = por %p78, %p79
    %s82 = sadd.s32 %s81, 1
    %p85 = scmp.eq.s32.totalorder %s21, 1
    %p86 = scmp.ne.s32.totalorder %s81, %s83
    %p87 = scmp.eq.s32.totalorder %s21, 0
    %p88 = por %p86, %p87
    %p89 = scmp.ne.s32.totalorder %s81, %s83
    %p90 = scmp.eq.s32.totalorder %s26, 1
    %p91 = por %p89, %p90
    %p92 = scmp.ne.s32.totalorder %s83, %s84
    %p93 = scmp.eq.s32.totalorder %s26, 0
    %p94 = por %p92, %p93
    %p95 = scmp.ne.s32.totalorder %s83, %s84
    %p96 = scmp.eq.s32.totalorder %s27, 1
    %p97 = por %p95, %p96
    %p99 = scmp.ne.s32.totalorder %s84, %s98
    %p100 = scmp.eq.s32.totalorder %s27, 0
    %p101 = por %p99, %p100
    %s103 = sadd.s32 %s102, 1
    %p106 = scmp.eq.s32.totalorder %s21, 1
    %p107 = scmp.ne.s32.totalorder %s102, %s104
    %p108 = scmp.eq.s32.totalorder %s21, 0
    %p109 = por %p107, %p108
    %p110 = scmp.ne.s32.totalorder %s102, %s104
    %p111 = scmp.eq.s32.totalorder %s26, 1
    %p112 = por %p110, %p111
    %p113 = scmp.ne.s32.totalorder %s104, %s105
    %p114 = scmp.eq.s32.totalorder %s26, 0
    %p115 = por %p113, %p114
    %p116 = scmp.ne.s32.totalorder %s104, %s105
    %p117 = scmp.eq.s32.totalorder %s27, 1
    %p118 = por %p116, %p117
    %p120 = scmp.ne.s32.totalorder %s105, %s119
    %p121 = scmp.eq.s32.totalorder %s27, 0
    %p122 = por %p120, %p121
    %s124 = sadd.s32 %s123, 1
    %p127 = scmp.eq.s32.totalorder %s21, 1
    %p128 = scmp.ne.s32.totalorder %s123, %s125
    %p129 = scmp.eq.s32.totalorder %s21, 0
    %p130 = por %p128, %p129
    %p131 = scmp.ne.s32.totalorder %s123, %s125
    %p132 = scmp.eq.s32.totalorder %s26, 1
    %p133 = por %p131, %p132
    %p134 = scmp.ne.s32.totalorder %s125, %s126
    %p135 = scmp.eq.s32.totalorder %s26, 0
    %p136 = por %p134, %p135
    %p137 = scmp.ne.s32.totalorder %s125, %s126
    %p138 = scmp.eq.s32.totalorder %s27, 1
    %p139 = por %p137, %p138
    %p141 = scmp.ne.s32.totalorder %s126, %s140
    %p142 = scmp.eq.s32.totalorder %s27, 0
    %p143 = por %p141, %p142
    %s145 = sadd.s32 %s144, 1
    %p148 = scmp.eq.s32.totalorder %s21, 1
    %p149 = scmp.ne.s32.totalorder %s144, %s146
    %p150 = scmp.eq.s32.totalorder %s21, 0
    %p151 = por %p149, %p150
    %p152 = scmp.ne.s32.totalorder %s144, %s146
    %p153 = scmp.eq.s32.totalorder %s26, 1
    %p154 = por %p152, %p153
    %p155 = scmp.ne.s32.totalorder %s146, %s147
    %p156 = scmp.eq.s32.totalorder %s26, 0
    %p157 = por %p155, %p156
    %p158 = scmp.ne.s32.totalorder %s146, %s147
    %p159 = scmp.eq.s32.totalorder %s27, 1
    %p160 = por %p158, %p159
    %p162 = scmp.ne.s32.totalorder %s147, %s161
    %p163 = scmp.eq.s32.totalorder %s27, 0
    %p164 = por %p162, %p163
    %s166 = sadd.s32 %s165, 1
    %p169 = scmp.eq.s32.totalorder %s21, 1
    %p170 = scmp.ne.s32.totalorder %s165, %s167
    %p171 = scmp.eq.s32.totalorder %s21, 0
    %p172 = por %p170, %p171
    %p173 = scmp.ne.s32.totalorder %s165, %s167
    %p174 = scmp.eq.s32.totalorder %s26, 1
    %p175 = por %p173, %p174
    %p176 = scmp.ne.s32.totalorder %s167, %s168
    %p177 = scmp.eq.s32.totalorder %s26, 0
    %p178 = por %p176, %p177
    %p179 = scmp.ne.s32.totalorder %s167, %s168
    %p180 = scmp.eq.s32.totalorder %s27, 1
    %p181 = por %p179, %p180
    %p183 = scmp.ne.s32.totalorder %s168, %s182
    %p184 = scmp.eq.s32.totalorder %s27, 0
    %p185 = por %p183, %p184
    %s187 = sadd.s32 %s186, 1
    %p190 = scmp.eq.s32.totalorder %s21, 1
    %p191 = scmp.ne.s32.totalorder %s186, %s188
    %p192 = scmp.eq.s32.totalorder %s21, 0
    %p193 = por %p191, %p192
    %p194 = scmp.ne.s32.totalorder %s186, %s188
    %p195 = scmp.eq.s32.totalorder %s26, 1
    %p196 = por %p194, %p195
    %p197 = scmp.ne.s32.totalorder %s188, %s189
    %p198 = scmp.eq.s32.totalorder %s26, 0
    %p199 = por %p197, %p198
    %p200 = scmp.ne.s32.totalorder %s188, %s189
    %p201 = scmp.eq.s32.totalorder %s27, 1
    %p202 = por %p200, %p201
    %p204 = scmp.ne.s32.totalorder %s189, %s203
    %p205 = scmp.eq.s32.totalorder %s27, 0
    %p206 = por %p204, %p205
    %s208 = sadd.s32 %s207, 1
    %p211 = scmp.eq.s32.totalorder %s21, 1
    %p212 = scmp.ne.s32.totalorder %s207, %s209
    %p213 = scmp.eq.s32.totalorder %s21, 0
    %p214 = por %p212, %p213
    %p215 = scmp.ne.s32.totalorder %s207, %s209
    %p216 = scmp.eq.s32.totalorder %s26, 1
    %p217 = por %p215, %p216
    %p218 = scmp.ne.s32.totalorder %s209, %s210
    %p219 = scmp.eq.s32.totalorder %s26, 0
    %p220 = por %p218, %p219
    %p221 = scmp.ne.s32.totalorder %s209, %s210
    %p222 = scmp.eq.s32.totalorder %s27, 1
    %p223 = por %p221, %p222
    %p225 = scmp.ne.s32.totalorder %s210, %s224
    %p226 = scmp.eq.s32.totalorder %s27, 0
    %p227 = por %p225, %p226
    %s229 = sadd.s32 %s228, 1
    %p232 = scmp.eq.s32.totalorder %s21, 1
    %p233 = scmp.ne.s32.totalorder %s228, %s230
    %p234 = scmp.eq.s32.totalorder %s21, 0
    %p235 = por %p233, %p234
    %p236 = scmp.ne.s32.totalorder %s228, %s230
    %p237 = scmp.eq.s32.totalorder %s26, 1
    %p238 = por %p236, %p237
    %p239 = scmp.ne.s32.totalorder %s230, %s231
    %p240 = scmp.eq.s32.totalorder %s26, 0
    %p241 = por %p239, %p240
    %p242 = scmp.ne.s32.totalorder %s230, %s231
    %p243 = scmp.eq.s32.totalorder %s27, 1
    %p244 = por %p242, %p243
    %p246 = scmp.ne.s32.totalorder %s231, %s245
    %p247 = scmp.eq.s32.totalorder %s27, 0
    %p248 = por %p246, %p247
    %s250 = sadd.s32 %s249, 1
    %p253 = scmp.eq.s32.totalorder %s21, 1
    %p254 = scmp.ne.s32.totalorder %s249, %s251
    %p255 = scmp.eq.s32.totalorder %s21, 0
    %p256 = por %p254, %p255
    %p257 = scmp.ne.s32.totalorder %s249, %s251
    %p258 = scmp.eq.s32.totalorder %s26, 1
    %p259 = por %p257, %p258
    %p260 = scmp.ne.s32.totalorder %s251, %s252
    %p261 = scmp.eq.s32.totalorder %s26, 0
    %p262 = por %p260, %p261
    %p263 = scmp.ne.s32.totalorder %s251, %s252
    %p264 = scmp.eq.s32.totalorder %s27, 1
    %p265 = por %p263, %p264
    %p267 = scmp.ne.s32.totalorder %s252, %s266
    %p268 = scmp.eq.s32.totalorder %s27, 0
    %p269 = por %p267, %p268
    %s271 = sadd.s32 %s270, 1
    %p274 = scmp.eq.s32.totalorder %s21, 1
    %p275 = scmp.ne.s32.totalorder %s270, %s272
    %p276 = scmp.eq.s32.totalorder %s21, 0
    %p277 = por %p275, %p276
    %p278 = scmp.ne.s32.totalorder %s270, %s272
    %p279 = scmp.eq.s32.totalorder %s26, 1
    %p280 = por %p278, %p279
    %p281 = scmp.ne.s32.totalorder %s272, %s273
    %p282 = scmp.eq.s32.totalorder %s26, 0
    %p283 = por %p281, %p282
    %p284 = scmp.ne.s32.totalorder %s272, %s273
    %p285 = scmp.eq.s32.totalorder %s27, 1
    %p286 = por %p284, %p285
    %p288 = scmp.ne.s32.totalorder %s273, %s287
    %p289 = scmp.eq.s32.totalorder %s27, 0
    %p290 = por %p288, %p289
    %s292 = sadd.s32 %s291, 1
    %p295 = scmp.eq.s32.totalorder %s21, 1
    %p296 = scmp.ne.s32.totalorder %s291, %s293
    %p297 = scmp.eq.s32.totalorder %s21, 0
    %p298 = por %p296, %p297
    %p299 = scmp.ne.s32.totalorder %s291, %s293
    %p300 = scmp.eq.s32.totalorder %s26, 1
    %p301 = por %p299, %p300
    %p302 = scmp.ne.s32.totalorder %s293, %s294
    %p303 = scmp.eq.s32.totalorder %s26, 0
    %p304 = por %p302, %p303
    %p305 = scmp.ne.s32.totalorder %s293, %s294
    %p306 = scmp.eq.s32.totalorder %s27, 1
    %p307 = por %p305, %p306
    %p309 = scmp.ne.s32.totalorder %s294, %s308
    %p310 = scmp.eq.s32.totalorder %s27, 0
    %p311 = por %p309, %p310
    %s313 = sadd.s32 %s312, 1
    %p316 = scmp.eq.s32.totalorder %s21, 1
    %p317 = scmp.ne.s32.totalorder %s312, %s314
    %p318 = scmp.eq.s32.totalorder %s21, 0
    %p319 = por %p317, %p318
    %p320 = scmp.ne.s32.totalorder %s312, %s314
    %p321 = scmp.eq.s32.totalorder %s26, 1
    %p322 = por %p320, %p321
    %p323 = scmp.ne.s32.totalorder %s314, %s315
    %p324 = scmp.eq.s32.totalorder %s26, 0
    %p325 = por %p323, %p324
    %p326 = scmp.ne.s32.totalorder %s314, %s315
    %p327 = scmp.eq.s32.totalorder %s27, 1
    %p328 = por %p326, %p327
    %p330 = scmp.ne.s32.totalorder %s315, %s329
    %p331 = scmp.eq.s32.totalorder %s27, 0
    %p332 = por %p330, %p331
    %s334 = sadd.s32 %s333, 1
    %p337 = scmp.eq.s32.totalorder %s21, 1
    %p338 = scmp.ne.s32.totalorder %s333, %s335
    %p339 = scmp.eq.s32.totalorder %s21, 0
    %p340 = por %p338, %p339
    %p341 = scmp.ne.s32.totalorder %s333, %s335
    %p342 = scmp.eq.s32.totalorder %s26, 1
    %p343 = por %p341, %p342
    %p344 = scmp.ne.s32.totalorder %s335, %s336
    %p345 = scmp.eq.s32.totalorder %s26, 0
    %p346 = por %p344, %p345
    %p347 = scmp.ne.s32.totalorder %s335, %s336
    %p348 = scmp.eq.s32.totalorder %s27, 1
    %p349 = por %p347, %p348
    %p351 = scmp.ne.s32.totalorder %s336, %s350
    %p352 = scmp.eq.s32.totalorder %s27, 0
    %p353 = por %p351, %p352
    %s354 = ssub.s32 %s21, %s28
    %p355 = scmp.eq.s32.totalorder %s354, 0
    %s357 = sadd.s32 %s356, 1
    %s358 = scalar_select %p355, %s356, %s357
    %p361 = pneg %p355
    %p362 = scmp.eq.s32.totalorder %s21, 1
    %p363 = por %p361, %p362
    %p364 = scmp.ne.s32.totalorder %s356, %s359
    %p365 = scmp.eq.s32.totalorder %s21, 0
    %p366 = por %p364, %p365
    %p367 = scmp.ne.s32.totalorder %s356, %s359
    %p368 = scmp.eq.s32.totalorder %s26, 1
    %p369 = por %p367, %p368
    %p370 = scmp.ne.s32.totalorder %s359, %s360
    %p371 = scmp.eq.s32.totalorder %s26, 0
    %p372 = por %p370, %p371
    %p373 = scmp.ne.s32.totalorder %s359, %s360
    %p374 = scmp.eq.s32.totalorder %s27, 1
    %p375 = por %p373, %p374
    %p377 = scmp.ne.s32.totalorder %s360, %s376
    %p378 = scmp.eq.s32.totalorder %s27, 0
    %p379 = por %p377, %p378
    %p380 = scmp.le.s32.totalorder 1, %s21
    %p381 = scmp.lt.s32.totalorder %s21, 3
    %p382 = pnand %p380, %p381
    %p383 = pneg %p382
    // Predicated region
    $region9: #{flowisam_forward.1} parent=5 // pred_check
      _
    $region10: #{flowisam_forward.1} parent=5 // pred_check_branch
      %385 = sbr.rel (%p382) target = $region12
    $region11: #{flowisam_forward.1} parent=5 // pred_region
      %s386 = ssub.s32 %s21, 1
      // Predicated region
      $region13: #{flowisam_forward.1} parent=11 // pred_check
        %p387 = pneg %p94
      $region14: #{flowisam_forward.1} parent=11 // pred_check_branch
        %389 = sbr.rel (%p387) target = $region16
      $region15: #{flowisam_forward.1} parent=11 // pred_region
        _
      $region16: #{flowisam_forward.1} parent=11 // pred_fallthru
        _
      // Predicated region
      $region17: #{flowisam_forward.1} parent=11 // pred_check
        %p390 = pneg %p115
      $region18: #{flowisam_forward.1} parent=11 // pred_check_branch
        %392 = sbr.rel (%p390) target = $region20
      $region19: #{flowisam_forward.1} parent=11 // pred_region
        _
      $region20: #{flowisam_forward.1} parent=11 // pred_fallthru
        _
      // Predicated region
      $region21: #{flowisam_forward.1} parent=11 // pred_check
        %p393 = pneg %p136
      $region22: #{flowisam_forward.1} parent=11 // pred_check_branch
        %395 = sbr.rel (%p393) target = $region24
      $region23: #{flowisam_forward.1} parent=11 // pred_region
        _
      $region24: #{flowisam_forward.1} parent=11 // pred_fallthru
        _
      // Predicated region
      $region25: #{flowisam_forward.1} parent=11 // pred_check
        %p396 = pneg %p157
      $region26: #{flowisam_forward.1} parent=11 // pred_check_branch
        %398 = sbr.rel (%p396) target = $region28
      $region27: #{flowisam_forward.1} parent=11 // pred_region
        _
      $region28: #{flowisam_forward.1} parent=11 // pred_fallthru
        _
      // Predicated region
      $region29: #{flowisam_forward.1} parent=11 // pred_check
        %p399 = pneg %p178
      $region30: #{flowisam_forward.1} parent=11 // pred_check_branch
        %401 = sbr.rel (%p399) target = $region32
      $region31: #{flowisam_forward.1} parent=11 // pred_region
        _
      $region32: #{flowisam_forward.1} parent=11 // pred_fallthru
        _
      // Predicated region
      $region33: #{flowisam_forward.1} parent=11 // pred_check
        %p402 = pneg %p199
      $region34: #{flowisam_forward.1} parent=11 // pred_check_branch
        %404 = sbr.rel (%p402) target = $region36
      $region35: #{flowisam_forward.1} parent=11 // pred_region
        _
      $region36: #{flowisam_forward.1} parent=11 // pred_fallthru
        _
      // Predicated region
      $region37: #{flowisam_forward.1} parent=11 // pred_check
        %p405 = pneg %p220
      $region38: #{flowisam_forward.1} parent=11 // pred_check_branch
        %407 = sbr.rel (%p405) target = $region40
      $region39: #{flowisam_forward.1} parent=11 // pred_region
        _
      $region40: #{flowisam_forward.1} parent=11 // pred_fallthru
        _
      // Predicated region
      $region41: #{flowisam_forward.1} parent=11 // pred_check
        %p408 = pneg %p241
      $region42: #{flowisam_forward.1} parent=11 // pred_check_branch
        %410 = sbr.rel (%p408) target = $region44
      $region43: #{flowisam_forward.1} parent=11 // pred_region
        _
      $region44: #{flowisam_forward.1} parent=11 // pred_fallthru
        _
      // Predicated region
      $region45: #{flowisam_forward.1} parent=11 // pred_check
        %p411 = pneg %p262
      $region46: #{flowisam_forward.1} parent=11 // pred_check_branch
        %413 = sbr.rel (%p411) target = $region48
      $region47: #{flowisam_forward.1} parent=11 // pred_region
        _
      $region48: #{flowisam_forward.1} parent=11 // pred_fallthru
        _
      // Predicated region
      $region49: #{flowisam_forward.1} parent=11 // pred_check
        %p414 = pneg %p283
      $region50: #{flowisam_forward.1} parent=11 // pred_check_branch
        %416 = sbr.rel (%p414) target = $region52
      $region51: #{flowisam_forward.1} parent=11 // pred_region
        _
      $region52: #{flowisam_forward.1} parent=11 // pred_fallthru
        _
      // Predicated region
      $region53: #{flowisam_forward.1} parent=11 // pred_check
        %p417 = pneg %p304
      $region54: #{flowisam_forward.1} parent=11 // pred_check_branch
        %419 = sbr.rel (%p417) target = $region56
      $region55: #{flowisam_forward.1} parent=11 // pred_region
        _
      $region56: #{flowisam_forward.1} parent=11 // pred_fallthru
        _
      // Predicated region
      $region57: #{flowisam_forward.1} parent=11 // pred_check
        %p420 = pneg %p325
      $region58: #{flowisam_forward.1} parent=11 // pred_check_branch
        %422 = sbr.rel (%p420) target = $region60
      $region59: #{flowisam_forward.1} parent=11 // pred_region
        _
      $region60: #{flowisam_forward.1} parent=11 // pred_fallthru
        _
      // Predicated region
      $region61: #{flowisam_forward.1} parent=11 // pred_check
        %p423 = pneg %p346
      $region62: #{flowisam_forward.1} parent=11 // pred_check_branch
        %425 = sbr.rel (%p423) target = $region64
      $region63: #{flowisam_forward.1} parent=11 // pred_region
        _
      $region64: #{flowisam_forward.1} parent=11 // pred_fallthru
        _
    $region12: #{flowisam_forward.1} parent=5 // pred_fallthru
      _
    %p426 = scmp.lt.s32.totalorder %s21, 2
    // Predicated region
    $region65: #{flowisam_forward.1} parent=5 // pred_check
      %p427 = pneg %p426
    $region66: #{flowisam_forward.1} parent=5 // pred_check_branch
      %429 = sbr.rel (%p427) target = $region68
    $region67: #{flowisam_forward.1} parent=5 // pred_region
      // Predicated region
      $region69: #{flowisam_forward.1} parent=67 // pred_check
        %p430 = pneg %p41
      $region70: #{flowisam_forward.1} parent=67 // pred_check_branch
        %432 = sbr.rel (%p430) target = $region72
      $region71: #{flowisam_forward.1} parent=67 // pred_region
        %p433 = scmp.lt.s32.totalorder %s21, 1
        %s434 = scalar_select %p433, %s21, 1
        %s435 = smul.addr %s434, 2
        %s436 = smul.addr %s435, 4
        %s437 = scalar_lea.vmem %s0, %s436
      $region72: #{flowisam_forward.1} parent=67 // pred_fallthru
        _
      // Predicated region
      $region73: #{flowisam_forward.1} parent=67 // pred_check
        %p438 = pneg %p67
      $region74: #{flowisam_forward.1} parent=67 // pred_check_branch
        %440 = sbr.rel (%p438) target = $region76
      $region75: #{flowisam_forward.1} parent=67 // pred_region
        %p441 = scmp.lt.s32.totalorder %s21, 1
        %s442 = scalar_select %p441, %s21, 1
        %s443 = smul.addr %s442, 8
        %s444 = scalar_lea.vmem %s1, %s443
      $region76: #{flowisam_forward.1} parent=67 // pred_fallthru
        _
    $region68: #{flowisam_forward.1} parent=5 // pred_fallthru
      _
    %p445 = scmp.le.s32.totalorder 1, %s21
    %p446 = scmp.lt.s32.totalorder %s21, 3
    %p447 = pnand %p445, %p446
    %p448 = pneg %p447
    // Predicated region
    $region77: #{flowisam_forward.1} parent=5 // pred_check
      _
    $region78: #{flowisam_forward.1} parent=5 // pred_check_branch
      %450 = sbr.rel (%p447) target = $region80
    $region79: #{flowisam_forward.1} parent=5 // pred_region
      %s451 = ssub.s32 %s21, 1
      %p452 = scmp.lt.s32.totalorder %s26, 1
      %s453 = scalar_select %p452, %s26, 1
      %s454 = smul.addr %s453, 2
      %s455 = smul.addr %s454, 4
      %s456 = scalar_lea.vmem %s0, %s455
      %p457 = pneg %p47
      %p458 = pneg %p44
      %p459 = scmp.lt.s32.totalorder %s26, 1
      %s460 = scalar_select %p459, %s26, 1
      %s461 = smul.addr %s460, 8
      %s462 = scalar_lea.vmem %s1, %s461
      %p463 = pneg %p73
      %p464 = pneg %p70
      %p465 = pneg %p94
      %p466 = pneg %p91
      %p467 = pneg %p115
      %p468 = pneg %p112
      %p469 = pneg %p136
      %p470 = pneg %p133
      %p471 = pneg %p157
      %p472 = pneg %p154
      %p473 = pneg %p178
      %p474 = pneg %p175
      %p475 = pneg %p199
      %p476 = pneg %p196
      %p477 = pneg %p220
      %p478 = pneg %p217
      %p479 = pneg %p241
      %p480 = pneg %p238
      %p481 = pneg %p262
      %p482 = pneg %p259
      %p483 = pneg %p283
      %p484 = pneg %p280
      %p485 = pneg %p304
      %p486 = pneg %p301
      %p487 = pneg %p325
      %p488 = pneg %p322
      %p489 = pneg %p346
      %p490 = pneg %p343
      %p491 = pneg %p372
      %p492 = pneg %p369
      %p493 = scmp.lt.s32.totalorder %s26, 1
      %s494 = scalar_select %p493, %s26, 1
      %s495 = smul.addr %s494, 8
      %s496 = smul.addr %s495, 4
      %s497 = scalar_lea.vmem %s15, %s496
      %p498 = scmp.lt.s32.totalorder %s26, 1
      %s499 = scalar_select %p498, %s26, 1
      %s500 = smul.addr %s499, 2
      %s501 = smul.addr %s500, 4
      %s502 = scalar_lea.vmem %s0, %s501
      %p503 = scmp.lt.s32.totalorder %s26, 1
      %s504 = scalar_select %p503, %s26, 1
      %s505 = smul.addr %s504, 8
      %s506 = scalar_lea.vmem %s1, %s505
      %p507 = scmp.lt.s32.totalorder %s26, 1
      %s508 = scalar_select %p507, %s26, 1
      %s509 = smul.addr %s508, 8
      %s510 = smul.addr %s509, 4
      %s511 = scalar_lea.vmem %s15, %s510
      %v513 = vld [vmem:[%s502] sm:$0xf]
      %v514 = vld [vmem:[%s502 + $0x4] sm:$0xf]
      %v515 = vld [vmem:[%s506] sm:$0xff]
      %v516 = vld [vmem:[%s4] sm:$0xf]
      %v517 = vld [vmem:[%s4 + $0x4] sm:$0xf]
      %v518 = vld [vmem:[%s4 + $0x8] sm:$0xf]
      %v519 = vld [vmem:[%s4 + $0xc] sm:$0xf]
      %v520 = vld [vmem:[%s4 + $0x10] sm:$0xf]
      %v521 = vld [vmem:[%s4 + $0x14] sm:$0xf]
      %v522 = vld [vmem:[%s4 + $0x18] sm:$0xf]
      %v523 = vld [vmem:[%s4 + $0x1c] sm:$0xf]
      %v524 = vld [vmem:[%s4 + $0x20] sm:$0xf]
      %v525 = vld [vmem:[%s4 + $0x24] sm:$0xf]
      %v526 = vld [vmem:[%s4 + $0x28] sm:$0xf]
      %v527 = vld [vmem:[%s4 + $0x2c] sm:$0xf]
      %v528 = vld [vmem:[%s4 + $0x30] sm:$0xf]
      %v529 = vld [vmem:[%s4 + $0x34] sm:$0xf]
      %v530 = vld [vmem:[%s4 + $0x38] sm:$0xf]
      %v531 = vld [vmem:[%s4 + $0x3c] sm:$0xf]
      %v532 = vld [vmem:[%s2] sm:$0x1]
      %v534 = vlaneseq
      %v535 = vshrl.u32 %v534, 7
      %v536 = vsub.s32 0, %v535
      %v537 = vrot.slane %v532, %v536
      %v541 = vunpack.c.l.b16 %v513
      %v542 = vunpack.c.l.b16 %v514
      %v543 = vpack.c.b16 %v542, %v541
      %v561 = vunpack.c.l.b16 %v516
      %v562 = vunpack.c.l.b16 %v517
      %v563 = vunpack.c.l.b16 %v518
      %v564 = vunpack.c.l.b16 %v519
      %v565 = vunpack.c.l.b16 %v520
      %v566 = vunpack.c.l.b16 %v521
      %v567 = vunpack.c.l.b16 %v522
      %v568 = vunpack.c.l.b16 %v523
      %v569 = vunpack.c.l.b16 %v524
      %v570 = vunpack.c.l.b16 %v525
      %v571 = vunpack.c.l.b16 %v526
      %v572 = vunpack.c.l.b16 %v527
      %v573 = vunpack.c.l.b16 %v528
      %v574 = vunpack.c.l.b16 %v529
      %v575 = vunpack.c.l.b16 %v530
      %v576 = vunpack.c.l.b16 %v531
      %v577 = vpack.c.b16 %v562, %v561
      %v578 = vpack.c.b16 %v564, %v563
      %v579 = vpack.c.b16 %v566, %v565
      %v580 = vpack.c.b16 %v568, %v567
      %v581 = vpack.c.b16 %v570, %v569
      %v582 = vpack.c.b16 %v572, %v571
      %v583 = vpack.c.b16 %v574, %v573
      %v584 = vpack.c.b16 %v576, %v575
      %593 = vmatprep.subr.bf16.mxu0 0
      %594 = vmatpush1.bf16.msra.mxu0 %v577
      %595 = vmatprep.subr.bf16.mxu0 0
      %596 = vmatpush1.bf16.msra.mxu0 %v578
      %597 = vmatprep.subr.bf16.mxu0 0
      %598 = vmatpush1.bf16.msra.mxu0 %v579
      %599 = vmatprep.subr.bf16.mxu0 0
      %600 = vmatpush1.bf16.msra.mxu0 %v580
      %601 = vmatprep.subr.bf16.mxu0 0
      %602 = vmatpush1.bf16.msra.mxu0 %v581
      %603 = vmatprep.subr.bf16.mxu0 0
      %604 = vmatpush1.bf16.msra.mxu0 %v582
      %605 = vmatprep.subr.bf16.mxu0 0
      %606 = vmatpush1.bf16.msra.mxu0 %v583
      %607 = vmatprep.subr.bf16.mxu0 0
      %608 = vmatpush1.bf16.msra.mxu0 %v584
      %609 = vmatprep.subr.bf16.mxu0 0
      %610 = vmatpush1.bf16.msra.mxu0 0
      %611 = vmatprep.subr.bf16.mxu0 0
      %612 = vmatpush1.bf16.msra.mxu0 0
      %613 = vmatprep.subr.bf16.mxu0 0
      %614 = vmatpush1.bf16.msra.mxu0 0
      %615 = vmatprep.subr.bf16.mxu0 0
      %616 = vmatpush1.bf16.msra.mxu0 0
      %617 = vmatprep.subr.bf16.mxu0 0
      %618 = vmatpush1.bf16.msra.mxu0 0
      %619 = vmatprep.subr.bf16.mxu0 0
      %620 = vmatpush1.bf16.msra.mxu0 0
      %621 = vmatprep.subr.bf16.mxu0 0
      %622 = vmatpush1.bf16.msra.mxu0 0
      %623 = vmatprep.subr.bf16.mxu0 0
      %624 = vmatpush1.bf16.msra.mxu0 0
      %625 = vmatprep.mubr.bf16.mxu0 0
      %626 = vmatmul.mubr.bf16.gmra.mrb[0].mxu0 %v543
      %v627 = vpop.f32.mrb[0].mxu0
      %v628 = vadd.f32 %v537, %v627
      %v629 = vpop.f32.mrb[0].mxu0
      %v630 = vpop.f32.mrb[0].mxu0
      %v631 = vadd.f32 %v537, %v630
      %v632 = vpop.f32.mrb[0].mxu0
      %633 = vdwg.mxu0
      %v634 = vpack.c.bf16 %v631, %v628
      %v635 = vpack.c.bf16 %v515, %v515
      %v636 = vld [vmem:[%s5] sm:$0xf]
      %v637 = vld [vmem:[%s5 + $0x4] sm:$0xf]
      %v638 = vld [vmem:[%s5 + $0x8] sm:$0xf]
      %v639 = vld [vmem:[%s5 + $0xc] sm:$0xf]
      %v644 = vunpack.c.l.b16 %v636
      %v645 = vunpack.c.l.b16 %v637
      %v646 = vunpack.c.l.b16 %v638
      %v647 = vunpack.c.l.b16 %v639
      %v648 = vpack.c.b16 %v645, %v644
      %v649 = vpack.c.b16 %v647, %v646
      %vm652 = vcmask 261120
      %v654 = vsel %vm652, %v635, 0
      %656 = vmatprep.subr.bf16.mxu0 0
      %657 = vmatpush1.bf16.msra.mxu0 %v648
      %658 = vmatprep.subr.bf16.mxu0 0
      %659 = vmatpush1.bf16.msra.mxu0 %v649
      %660 = vmatprep.subr.bf16.mxu0 0
      %661 = vmatpush1.bf16.msra.mxu0 0
      %662 = vmatprep.subr.bf16.mxu0 0
      %663 = vmatpush1.bf16.msra.mxu0 0
      %664 = vmatprep.subr.bf16.mxu0 0
      %665 = vmatpush1.bf16.msra.mxu0 0
      %666 = vmatprep.subr.bf16.mxu0 0
      %667 = vmatpush1.bf16.msra.mxu0 0
      %668 = vmatprep.subr.bf16.mxu0 0
      %669 = vmatpush1.bf16.msra.mxu0 0
      %670 = vmatprep.subr.bf16.mxu0 0
      %671 = vmatpush1.bf16.msra.mxu0 0
      %672 = vmatprep.subr.bf16.mxu0 0
      %673 = vmatpush1.bf16.msra.mxu0 0
      %674 = vmatprep.subr.bf16.mxu0 0
      %675 = vmatpush1.bf16.msra.mxu0 0
      %676 = vmatprep.subr.bf16.mxu0 0
      %677 = vmatpush1.bf16.msra.mxu0 0
      %678 = vmatprep.subr.bf16.mxu0 0
      %679 = vmatpush1.bf16.msra.mxu0 0
      %680 = vmatprep.subr.bf16.mxu0 0
      %681 = vmatpush1.bf16.msra.mxu0 0
      %682 = vmatprep.subr.bf16.mxu0 0
      %683 = vmatpush1.bf16.msra.mxu0 0
      %684 = vmatprep.subr.bf16.mxu0 0
      %685 = vmatpush1.bf16.msra.mxu0 0
      %686 = vmatprep.subr.bf16.mxu0 0
      %687 = vmatpush1.bf16.msra.mxu0 0
      %688 = vmatprep.mubr.bf16.mxu0 0
      %689 = vmatmul.mubr.bf16.gmra.mrb[0].mxu0 %v654
      %v690 = vpop.f32.mrb[0].mxu0
      %v691 = vadd.f32 0.0, %v690
      %v692 = vpop.f32.mrb[0].mxu0
      %v693 = vpop.f32.mrb[0].mxu0
      %v694 = vpop.f32.mrb[0].mxu0
      %695 = vdwg.mxu0
      %v696 = vld [vmem:[%s6] sm:$0xf]
      %v697 = vld [vmem:[%s6 + $0x4] sm:$0xf]
      %v698 = vld [vmem:[%s6 + $0x8] sm:$0xf]
      %v699 = vld [vmem:[%s6 + $0xc] sm:$0xf]
      %v704 = vunpack.c.l.b16 %v696
      %v705 = vunpack.c.l.b16 %v697
      %v706 = vunpack.c.l.b16 %v698
      %v707 = vunpack.c.l.b16 %v699
      %v708 = vpack.c.b16 %v705, %v704
      %v709 = vpack.c.b16 %v707, %v706
      %v713 = vsel %vm652, %v634, 0
      %715 = vmatprep.subr.bf16.mxu0 0
      %716 = vmatpush1.bf16.msra.mxu0 %v708
      %717 = vmatprep.subr.bf16.mxu0 0
      %718 = vmatpush1.bf16.msra.mxu0 %v709
      %719 = vmatprep.subr.bf16.mxu0 0
      %720 = vmatpush1.bf16.msra.mxu0 0
      %721 = vmatprep.subr.bf16.mxu0 0
      %722 = vmatpush1.bf16.msra.mxu0 0
      %723 = vmatprep.subr.bf16.mxu0 0
      %724 = vmatpush1.bf16.msra.mxu0 0
      %725 = vmatprep.subr.bf16.mxu0 0
      %726 = vmatpush1.bf16.msra.mxu0 0
      %727 = vmatprep.subr.bf16.mxu0 0
      %728 = vmatpush1.bf16.msra.mxu0 0
      %729 = vmatprep.subr.bf16.mxu0 0
      %730 = vmatpush1.bf16.msra.mxu0 0
      %731 = vmatprep.subr.bf16.mxu0 0
      %732 = vmatpush1.bf16.msra.mxu0 0
      %733 = vmatprep.subr.bf16.mxu0 0
      %734 = vmatpush1.bf16.msra.mxu0 0
      %735 = vmatprep.subr.bf16.mxu0 0
      %736 = vmatpush1.bf16.msra.mxu0 0
      %737 = vmatprep.subr.bf16.mxu0 0
      %738 = vmatpush1.bf16.msra.mxu0 0
      %739 = vmatprep.subr.bf16.mxu0 0
      %740 = vmatpush1.bf16.msra.mxu0 0
      %741 = vmatprep.subr.bf16.mxu0 0
      %742 = vmatpush1.bf16.msra.mxu0 0
      %743 = vmatprep.subr.bf16.mxu0 0
      %744 = vmatpush1.bf16.msra.mxu0 0
      %745 = vmatprep.subr.bf16.mxu0 0
      %746 = vmatpush1.bf16.msra.mxu0 0
      %747 = vmatprep.mubr.bf16.mxu0 0
      %748 = vmatmul.mubr.bf16.gmra.mrb[0].mxu0 %v713
      %v749 = vpop.f32.mrb[0].mxu0
      %v750 = vadd.f32 0.0, %v749
      %v751 = vpop.f32.mrb[0].mxu0
      %v752 = vpop.f32.mrb[0].mxu0
      %v753 = vadd.f32 0.0, %v752
      %v754 = vpop.f32.mrb[0].mxu0
      %755 = vdwg.mxu0
      %v756 = vld [vmem:[%s3] sm:$0xff]
      %v757 = vld [vmem:[%s3 + $0x8] sm:$0xff]
      %v758 = vadd.f32 %v750, %v756
      %v759 = vadd.f32 %v753, %v757
      %v761 = vsel %vm652, %v691, 0
      %v764 = vsel %vm652, %v758, 0
      %v767 = vsel %vm652, %v759, 0
      %769 = vmatprep.subr.mxu0 0.0
      %770 = vmatpush1.xpose.msra.mxu0 %v764
      %771 = vmatprep.subr.mxu0 0.0
      %772 = vmatpush1.xpose.msra.mxu0 %v767
      %773 = vmatprep.subr.mxu0 0.0
      %774 = vmatpush1.xpose.msra.mxu0 0.0
      %775 = vmatprep.subr.mxu0 0.0
      %776 = vmatpush1.xpose.msra.mxu0 0.0
      %777 = vmatprep.subr.mxu0 0.0
      %778 = vmatpush1.xpose.msra.mxu0 0.0
      %779 = vmatprep.subr.mxu0 0.0
      %780 = vmatpush1.xpose.msra.mxu0 0.0
      %781 = vmatprep.subr.mxu0 0.0
      %782 = vmatpush1.xpose.msra.mxu0 0.0
      %783 = vmatprep.subr.mxu0 0.0
      %784 = vmatpush1.xpose.msra.mxu0 0.0
      %785 = vmatprep.subr.mxu0 0.0
      %786 = vmatpush1.xpose.msra.mxu0 0.0
      %787 = vmatprep.subr.mxu0 0.0
      %788 = vmatpush1.xpose.msra.mxu0 0.0
      %789 = vmatprep.subr.mxu0 0.0
      %790 = vmatpush1.xpose.msra.mxu0 0.0
      %791 = vmatprep.subr.mxu0 0.0
      %792 = vmatpush1.xpose.msra.mxu0 0.0
      %793 = vmatprep.subr.mxu0 0.0
      %794 = vmatpush1.xpose.msra.mxu0 0.0
      %795 = vmatprep.subr.mxu0 0.0
      %796 = vmatpush1.xpose.msra.mxu0 0.0
      %797 = vmatprep.subr.mxu0 0.0
      %798 = vmatpush1.xpose.msra.mxu0 0.0
      %799 = vmatprep.subr.mxu0 0.0
      %800 = vmatpush1.xpose.msra.mxu0 0.0
      %801 = vmatprep.subr.mxu0 0.0
      %802 = vmatpush1.xpose.msra.mxu0 0.0
      %803 = vmatprep.subr.mxu0 0.0
      %804 = vmatpush1.xpose.msra.mxu0 0.0
      %805 = vmatprep.subr.mxu0 0.0
      %806 = vmatpush1.xpose.msra.mxu0 0.0
      %807 = vmatprep.subr.mxu0 0.0
      %808 = vmatpush1.xpose.msra.mxu0 0.0
      %809 = vmatprep.subr.mxu0 0.0
      %810 = vmatpush1.xpose.msra.mxu0 0.0
      %811 = vmatprep.subr.mxu0 0.0
      %812 = vmatpush1.xpose.msra.mxu0 0.0
      %813 = vmatprep.subr.mxu0 0.0
      %814 = vmatpush1.xpose.msra.mxu0 0.0
      %815 = vmatprep.subr.mxu0 0.0
      %816 = vmatpush1.xpose.msra.mxu0 0.0
      %817 = vmatprep.subr.mxu0 0.0
      %818 = vmatpush1.xpose.msra.mxu0 0.0
      %819 = vmatprep.subr.mxu0 0.0
      %820 = vmatpush1.xpose.msra.mxu0 0.0
      %821 = vmatprep.subr.mxu0 0.0
      %822 = vmatpush1.xpose.msra.mxu0 0.0
      %823 = vmatprep.subr.mxu0 0.0
      %824 = vmatpush1.xpose.msra.mxu0 0.0
      %825 = vmatprep.subr.mxu0 0.0
      %826 = vmatpush1.xpose.msra.mxu0 0.0
      %827 = vmatprep.subr.mxu0 0.0
      %828 = vmatpush1.xpose.msra.mxu0 0.0
      %829 = vmatprep.subr.mxu0 0.0
      %830 = vmatpush1.xpose.msra.mxu0 0.0
      %831 = vmatprep.subr.mxu0 0.0
      %832 = vmatpush1.xpose.msra.mxu0 0.0
      %833 = vmatprep.mubr.f32.mxu0 0.0
      %834 = vmatmul.mubr.f32.gmra.mrb[0].mxu0 %v761
      %v835 = vpop.f32.mrb[0].mxu0
      %v836 = vadd.f32 0.0, %v835
      %v837 = vpop.f32.mrb[0].mxu0
      %838 = vdwg.mxu0
      %vm839 = vcmask 130048
      %v840 = vsel %vm839, %v836, -inf
      %841 = vmax.xlane.f32.xlu0 %v840
      %v842 = vpop.xlane.xlu0 %841
      %v843 = vsub.f32 %v836, %v842
      %v844 = vmul.f32 %v843, 1.442695
      %v845 = vpow.pop %v844
      %v846 = vsel %vm839, %v845, 0.0
      %847 = vadd.xlane.f32.xlu0 %v846
      %v848 = vpop.xlane.xlu0 %847
      %v849 = vrcp.pop %v848
      %v850 = vmul.f32 %v845, %v849
      %v851 = vpack.c.bf16 %v850, %v850
      %v852 = vpack.c.bf16 %v753, %v750
      %854 = vrot.lane.b32.xlu0 %v852, 96
      %v855 = vpop.permute.xlu0 %854
      %v858 = vsel %vm839, %v851, 0
      %860 = vmatprep.subr.bf16.mxu0 0
      %861 = vmatpush1.bf16.msra.mxu0 %v855
      %862 = vmatprep.subr.bf16.mxu0 0
      %863 = vmatpush1.bf16.msra.mxu0 0
      %864 = vmatprep.subr.bf16.mxu0 0
      %865 = vmatpush1.bf16.msra.mxu0 0
      %866 = vmatprep.subr.bf16.mxu0 0
      %867 = vmatpush1.bf16.msra.mxu0 0
      %868 = vmatprep.subr.bf16.mxu0 0
      %869 = vmatpush1.bf16.msra.mxu0 0
      %870 = vmatprep.subr.bf16.mxu0 0
      %871 = vmatpush1.bf16.msra.mxu0 0
      %872 = vmatprep.subr.bf16.mxu0 0
      %873 = vmatpush1.bf16.msra.mxu0 0
      %874 = vmatprep.subr.bf16.mxu0 0
      %875 = vmatpush1.bf16.msra.mxu0 0
      %876 = vmatprep.subr.bf16.mxu0 0
      %877 = vmatpush1.bf16.msra.mxu0 0
      %878 = vmatprep.subr.bf16.mxu0 0
      %879 = vmatpush1.bf16.msra.mxu0 0
      %880 = vmatprep.subr.bf16.mxu0 0
      %881 = vmatpush1.bf16.msra.mxu0 0
      %882 = vmatprep.subr.bf16.mxu0 0
      %883 = vmatpush1.bf16.msra.mxu0 0
      %884 = vmatprep.subr.bf16.mxu0 0
      %885 = vmatpush1.bf16.msra.mxu0 0
      %886 = vmatprep.subr.bf16.mxu0 0
      %887 = vmatpush1.bf16.msra.mxu0 0
      %888 = vmatprep.subr.bf16.mxu0 0
      %889 = vmatpush1.bf16.msra.mxu0 0
      %890 = vmatprep.subr.bf16.mxu0 0
      %891 = vmatpush1.bf16.msra.mxu0 0
      %892 = vmatprep.mubr.bf16.mxu0 0
      %893 = vmatmul.mubr.bf16.gmra.mrb[0].mxu0 %v858
      %v894 = vpop.f32.mrb[0].mxu0
      %v895 = vadd.f32 0.0, %v894
      %v896 = vpop.f32.mrb[0].mxu0
      %v897 = vpop.f32.mrb[0].mxu0
      %v898 = vpop.f32.mrb[0].mxu0
      %899 = vdwg.mxu0
      %v900 = vpack.c.bf16 %v895, %v895
      %v901 = vld [vmem:[%s7] sm:$0xf]
      %v902 = vld [vmem:[%s7 + $0x4] sm:$0xf]
      %v903 = vld [vmem:[%s7 + $0x8] sm:$0xf]
      %v904 = vld [vmem:[%s7 + $0xc] sm:$0xf]
      %v909 = vunpack.c.l.b16 %v901
      %v910 = vunpack.c.l.b16 %v902
      %v911 = vunpack.c.l.b16 %v903
      %v912 = vunpack.c.l.b16 %v904
      %v913 = vpack.c.b16 %v910, %v909
      %v914 = vpack.c.b16 %v912, %v911
      %v918 = vsel %vm652, %v900, 0
      %920 = vmatprep.subr.bf16.mxu0 0
      %921 = vmatpush1.bf16.msra.mxu0 %v913
      %922 = vmatprep.subr.bf16.mxu0 0
      %923 = vmatpush1.bf16.msra.mxu0 %v914
      %924 = vmatprep.subr.bf16.mxu0 0
      %925 = vmatpush1.bf16.msra.mxu0 0
      %926 = vmatprep.subr.bf16.mxu0 0
      %927 = vmatpush1.bf16.msra.mxu0 0
      %928 = vmatprep.subr.bf16.mxu0 0
      %929 = vmatpush1.bf16.msra.mxu0 0
      %930 = vmatprep.subr.bf16.mxu0 0
      %931 = vmatpush1.bf16.msra.mxu0 0
      %932 = vmatprep.subr.bf16.mxu0 0
      %933 = vmatpush1.bf16.msra.mxu0 0
      %934 = vmatprep.subr.bf16.mxu0 0
      %935 = vmatpush1.bf16.msra.mxu0 0
      %936 = vmatprep.subr.bf16.mxu0 0
      %937 = vmatpush1.bf16.msra.mxu0 0
      %938 = vmatprep.subr.bf16.mxu0 0
      %939 = vmatpush1.bf16.msra.mxu0 0
      %940 = vmatprep.subr.bf16.mxu0 0
      %941 = vmatpush1.bf16.msra.mxu0 0
      %942 = vmatprep.subr.bf16.mxu0 0
      %943 = vmatpush1.bf16.msra.mxu0 0
      %944 = vmatprep.subr.bf16.mxu0 0
      %945 = vmatpush1.bf16.msra.mxu0 0
      %946 = vmatprep.subr.bf16.mxu0 0
      %947 = vmatpush1.bf16.msra.mxu0 0
      %948 = vmatprep.subr.bf16.mxu0 0
      %949 = vmatpush1.bf16.msra.mxu0 0
      %950 = vmatprep.subr.bf16.mxu0 0
      %951 = vmatpush1.bf16.msra.mxu0 0
      %952 = vmatprep.mubr.bf16.mxu0 0
      %953 = vmatmul.mubr.bf16.gmra.mrb[0].mxu0 %v918
      %v954 = vpop.f32.mrb[0].mxu0
      %v955 = vadd.f32 0.0, %v954
      %v956 = vpop.f32.mrb[0].mxu0
      %v957 = vpop.f32.mrb[0].mxu0
      %v958 = vpop.f32.mrb[0].mxu0
      %959 = vdwg.mxu0
      %v960 = vadd.f32 %v515, %v955
      %v961 = vpack.c.bf16 %v960, %v960
      %v962 = vld [vmem:[%s12] sm:$0xff]
      %v963 = vld [vmem:[%s12 + $0x8] sm:$0xff]
      %v964 = vld [vmem:[%s12 + $0x10] sm:$0xff]
      %v965 = vld [vmem:[%s12 + $0x18] sm:$0xff]
      %v966 = vld [vmem:[%s12 + $0x20] sm:$0xff]
      %v967 = vld [vmem:[%s12 + $0x28] sm:$0xff]
      %v968 = vld [vmem:[%s12 + $0x30] sm:$0xff]
      %v969 = vld [vmem:[%s12 + $0x38] sm:$0xff]
      %v970 = vld [vmem:[%s12 + $0x40] sm:$0xff]
      %v971 = vld [vmem:[%s12 + $0x48] sm:$0xff]
      %v972 = vld [vmem:[%s12 + $0x50] sm:$0xff]
      %v973 = vld [vmem:[%s12 + $0x58] sm:$0xff]
      %v974 = vld [vmem:[%s12 + $0x60] sm:$0xff]
      %v975 = vld [vmem:[%s12 + $0x68] sm:$0xff]
      %v976 = vld [vmem:[%s12 + $0x70] sm:$0xff]
      %v977 = vld [vmem:[%s12 + $0x78] sm:$0xff]
      %v978 = vld [vmem:[%s13] sm:$0xff]
      %v995 = vunpack.c.l.b16 %v962
      %v996 = vunpack.c.h.b16 %v962
      %v997 = vunpack.c.l.b16 %v963
      %v998 = vunpack.c.h.b16 %v963
      %v999 = vunpack.c.l.b16 %v964
      %v1000 = vunpack.c.h.b16 %v964
      %v1001 = vunpack.c.l.b16 %v965
      %v1002 = vunpack.c.h.b16 %v965
      %v1003 = vunpack.c.l.b16 %v966
      %v1004 = vunpack.c.h.b16 %v966
      %v1005 = vunpack.c.l.b16 %v967
      %v1006 = vunpack.c.h.b16 %v967
      %v1007 = vunpack.c.l.b16 %v968
      %v1008 = vunpack.c.h.b16 %v968
      %v1009 = vunpack.c.l.b16 %v969
      %v1010 = vunpack.c.h.b16 %v969
      %v1011 = vunpack.c.l.b16 %v970
      %v1012 = vunpack.c.h.b16 %v970
      %v1013 = vunpack.c.l.b16 %v971
      %v1014 = vunpack.c.h.b16 %v971
      %v1015 = vunpack.c.l.b16 %v972
      %v1016 = vunpack.c.h.b16 %v972
      %v1017 = vunpack.c.l.b16 %v973
      %v1018 = vunpack.c.h.b16 %v973
      %v1019 = vunpack.c.l.b16 %v974
      %v1020 = vunpack.c.h.b16 %v974
      %v1021 = vunpack.c.l.b16 %v975
      %v1022 = vunpack.c.h.b16 %v975
      %v1023 = vunpack.c.l.b16 %v976
      %v1024 = vunpack.c.h.b16 %v976
      %v1025 = vunpack.c.l.b16 %v977
      %v1026 = vunpack.c.h.b16 %v977
      %v1027 = vpack.c.b16 %v1003, %v995
      %v1028 = vpack.c.b16 %v1004, %v996
      %v1029 = vpack.c.b16 %v1005, %v997
      %v1030 = vpack.c.b16 %v1006, %v998
      %v1031 = vpack.c.b16 %v1007, %v999
      %v1032 = vpack.c.b16 %v1008, %v1000
      %v1033 = vpack.c.b16 %v1009, %v1001
      %v1034 = vpack.c.b16 %v1010, %v1002
      %v1035 = vpack.c.b16 %v1019, %v1011
      %v1036 = vpack.c.b16 %v1020, %v1012
      %v1037 = vpack.c.b16 %v1021, %v1013
      %v1038 = vpack.c.b16 %v1022, %v1014
      %v1039 = vpack.c.b16 %v1023, %v1015
      %v1040 = vpack.c.b16 %v1024, %v1016
      %v1041 = vpack.c.b16 %v1025, %v1017
      %v1042 = vpack.c.b16 %v1026, %v1018
      %v1060 = vlaneseq
      %v1061 = vshrl.u32 %v1060, 7
      %v1062 = vsub.s32 0, %v1061
      %v1063 = vrot.slane %v978, %v1062
      %v1064 = vlaneseq
      %v1065 = vshrl.u32 %v1064, 7
      %v1066 = vsub.s32 1, %v1065
      %v1067 = vrot.slane %v978, %v1066
      %v1068 = vlaneseq
      %v1069 = vshrl.u32 %v1068, 7
      %v1070 = vsub.s32 2, %v1069
      %v1071 = vrot.slane %v978, %v1070
      %v1072 = vlaneseq
      %v1073 = vshrl.u32 %v1072, 7
      %v1074 = vsub.s32 3, %v1073
      %v1075 = vrot.slane %v978, %v1074
      %v1076 = vlaneseq
      %v1077 = vshrl.u32 %v1076, 7
      %v1078 = vsub.s32 4, %v1077
      %v1079 = vrot.slane %v978, %v1078
      %v1080 = vlaneseq
      %v1081 = vshrl.u32 %v1080, 7
      %v1082 = vsub.s32 5, %v1081
      %v1083 = vrot.slane %v978, %v1082
      %v1084 = vlaneseq
      %v1085 = vshrl.u32 %v1084, 7
      %v1086 = vsub.s32 6, %v1085
      %v1087 = vrot.slane %v978, %v1086
      %v1088 = vlaneseq
      %v1089 = vshrl.u32 %v1088, 7
      %v1090 = vsub.s32 7, %v1089
      %v1091 = vrot.slane %v978, %v1090
      %v1101 = vsel %vm652, %v961, 0
      %1103 = vmatprep.subr.bf16.mxu0 %v1028
      %1104 = vmatpush1.bf16.msra.mxu0 %v1027
      %1105 = vmatprep.subr.bf16.mxu0 %v1036
      %1106 = vmatpush1.bf16.msra.mxu0 %v1035
      %1107 = vmatprep.subr.bf16.mxu0 0
      %1108 = vmatpush1.bf16.msra.mxu0 0
      %1109 = vmatprep.subr.bf16.mxu0 0
      %1110 = vmatpush1.bf16.msra.mxu0 0
      %1111 = vmatprep.subr.bf16.mxu0 0
      %1112 = vmatpush1.bf16.msra.mxu0 0
      %1113 = vmatprep.subr.bf16.mxu0 0
      %1114 = vmatpush1.bf16.msra.mxu0 0
      %1115 = vmatprep.subr.bf16.mxu0 0
      %1116 = vmatpush1.bf16.msra.mxu0 0
      %1117 = vmatprep.subr.bf16.mxu0 0
      %1118 = vmatpush1.bf16.msra.mxu0 0
      %1119 = vmatprep.subr.bf16.mxu0 0
      %1120 = vmatpush1.bf16.msra.mxu0 0
      %1121 = vmatprep.subr.bf16.mxu0 0
      %1122 = vmatpush1.bf16.msra.mxu0 0
      %1123 = vmatprep.subr.bf16.mxu0 0
      %1124 = vmatpush1.bf16.msra.mxu0 0
      %1125 = vmatprep.subr.bf16.mxu0 0
      %1126 = vmatpush1.bf16.msra.mxu0 0
      %1127 = vmatprep.subr.bf16.mxu0 0
      %1128 = vmatpush1.bf16.msra.mxu0 0
      %1129 = vmatprep.subr.bf16.mxu0 0
      %1130 = vmatpush1.bf16.msra.mxu0 0
      %1131 = vmatprep.subr.bf16.mxu0 0
      %1132 = vmatpush1.bf16.msra.mxu0 0
      %1133 = vmatprep.subr.bf16.mxu0 0
      %1134 = vmatpush1.bf16.msra.mxu0 0
      %1135 = vmatprep.mubr.bf16.mxu0 0
      %1136 = vmatmul.mubr.bf16.gmra.mrb[0].mxu0 %v1101
      %v1137 = vpop.f32.mrb[0].mxu0
      %v1138 = vadd.f32 %v1063, %v1137
      %v1139 = vpop.f32.mrb[0].mxu0
      %v1140 = vadd.f32 %v1067, %v1139
      %v1141 = vpop.f32.mrb[0].mxu0
      %v1142 = vpop.f32.mrb[0].mxu0
      %1143 = vdwg.mxu0
      %1144 = vmatprep.subr.bf16.mxu0 %v1030
      %1145 = vmatpush1.bf16.msra.mxu0 %v1029
      %1146 = vmatprep.subr.bf16.mxu0 %v1038
      %1147 = vmatpush1.bf16.msra.mxu0 %v1037
      %1148 = vmatprep.subr.bf16.mxu0 0
      %1149 = vmatpush1.bf16.msra.mxu0 0
      %1150 = vmatprep.subr.bf16.mxu0 0
      %1151 = vmatpush1.bf16.msra.mxu0 0
      %1152 = vmatprep.subr.bf16.mxu0 0
      %1153 = vmatpush1.bf16.msra.mxu0 0
      %1154 = vmatprep.subr.bf16.mxu0 0
      %1155 = vmatpush1.bf16.msra.mxu0 0
      %1156 = vmatprep.subr.bf16.mxu0 0
      %1157 = vmatpush1.bf16.msra.mxu0 0
      %1158 = vmatprep.subr.bf16.mxu0 0
      %1159 = vmatpush1.bf16.msra.mxu0 0
      %1160 = vmatprep.subr.bf16.mxu0 0
      %1161 = vmatpush1.bf16.msra.mxu0 0
      %1162 = vmatprep.subr.bf16.mxu0 0
      %1163 = vmatpush1.bf16.msra.mxu0 0
      %1164 = vmatprep.subr.bf16.mxu0 0
      %1165 = vmatpush1.bf16.msra.mxu0 0
      %1166 = vmatprep.subr.bf16.mxu0 0
      %1167 = vmatpush1.bf16.msra.mxu0 0
      %1168 = vmatprep.subr.bf16.mxu0 0
      %1169 = vmatpush1.bf16.msra.mxu0 0
      %1170 = vmatprep.subr.bf16.mxu0 0
      %1171 = vmatpush1.bf16.msra.mxu0 0
      %1172 = vmatprep.subr.bf16.mxu0 0
      %1173 = vmatpush1.bf16.msra.mxu0 0
      %1174 = vmatprep.subr.bf16.mxu0 0
      %1175 = vmatpush1.bf16.msra.mxu0 0
      %1176 = vmatprep.mubr.bf16.mxu0 0
      %1177 = vmatmul.mubr.bf16.gmra.mrb[0].mxu0 %v1101
      %v1178 = vpop.f32.mrb[0].mxu0
      %v1179 = vadd.f32 %v1071, %v1178
      %v1180 = vpop.f32.mrb[0].mxu0
      %v1181 = vadd.f32 %v1075, %v1180
      %v1182 = vpop.f32.mrb[0].mxu0
      %v1183 = vpop.f32.mrb[0].mxu0
      %1184 = vdwg.mxu0
      %1185 = vmatprep.subr.bf16.mxu0 %v1032
      %1186 = vmatpush1.bf16.msra.mxu0 %v1031
      %1187 = vmatprep.subr.bf16.mxu0 %v1040
      %1188 = vmatpush1.bf16.msra.mxu0 %v1039
      %1189 = vmatprep.subr.bf16.mxu0 0
      %1190 = vmatpush1.bf16.msra.mxu0 0
      %1191 = vmatprep.subr.bf16.mxu0 0
      %1192 = vmatpush1.bf16.msra.mxu0 0
      %1193 = vmatprep.subr.bf16.mxu0 0
      %1194 = vmatpush1.bf16.msra.mxu0 0
      %1195 = vmatprep.subr.bf16.mxu0 0
      %1196 = vmatpush1.bf16.msra.mxu0 0
      %1197 = vmatprep.subr.bf16.mxu0 0
      %1198 = vmatpush1.bf16.msra.mxu0 0
      %1199 = vmatprep.subr.bf16.mxu0 0
      %1200 = vmatpush1.bf16.msra.mxu0 0
      %1201 = vmatprep.subr.bf16.mxu0 0
      %1202 = vmatpush1.bf16.msra.mxu0 0
      %1203 = vmatprep.subr.bf16.mxu0 0
      %1204 = vmatpush1.bf16.msra.mxu0 0
      %1205 = vmatprep.subr.bf16.mxu0 0
      %1206 = vmatpush1.bf16.msra.mxu0 0
      %1207 = vmatprep.subr.bf16.mxu0 0
      %1208 = vmatpush1.bf16.msra.mxu0 0
      %1209 = vmatprep.subr.bf16.mxu0 0
      %1210 = vmatpush1.bf16.msra.mxu0 0
      %1211 = vmatprep.subr.bf16.mxu0 0
      %1212 = vmatpush1.bf16.msra.mxu0 0
      %1213 = vmatprep.subr.bf16.mxu0 0
      %1214 = vmatpush1.bf16.msra.mxu0 0
      %1215 = vmatprep.subr.bf16.mxu0 0
      %1216 = vmatpush1.bf16.msra.mxu0 0
      %1217 = vmatprep.mubr.bf16.mxu0 0
      %1218 = vmatmul.mubr.bf16.gmra.mrb[0].mxu0 %v1101
      %v1219 = vpop.f32.mrb[0].mxu0
      %v1220 = vadd.f32 %v1079, %v1219
      %v1221 = vpop.f32.mrb[0].mxu0
      %v1222 = vadd.f32 %v1083, %v1221
      %v1223 = vpop.f32.mrb[0].mxu0
      %v1224 = vpop.f32.mrb[0].mxu0
      %1225 = vdwg.mxu0
      %1226 = vmatprep.subr.bf16.mxu0 %v1034
      %1227 = vmatpush1.bf16.msra.mxu0 %v1033
      %1228 = vmatprep.subr.bf16.mxu0 %v1042
      %1229 = vmatpush1.bf16.msra.mxu0 %v1041
      %1230 = vmatprep.subr.bf16.mxu0 0
      %1231 = vmatpush1.bf16.msra.mxu0 0
      %1232 = vmatprep.subr.bf16.mxu0 0
      %1233 = vmatpush1.bf16.msra.mxu0 0
      %1234 = vmatprep.subr.bf16.mxu0 0
      %1235 = vmatpush1.bf16.msra.mxu0 0
      %1236 = vmatprep.subr.bf16.mxu0 0
      %1237 = vmatpush1.bf16.msra.mxu0 0
      %1238 = vmatprep.subr.bf16.mxu0 0
      %1239 = vmatpush1.bf16.msra.mxu0 0
      %1240 = vmatprep.subr.bf16.mxu0 0
      %1241 = vmatpush1.bf16.msra.mxu0 0
      %1242 = vmatprep.subr.bf16.mxu0 0
      %1243 = vmatpush1.bf16.msra.mxu0 0
      %1244 = vmatprep.subr.bf16.mxu0 0
      %1245 = vmatpush1.bf16.msra.mxu0 0
      %1246 = vmatprep.subr.bf16.mxu0 0
      %1247 = vmatpush1.bf16.msra.mxu0 0
      %1248 = vmatprep.subr.bf16.mxu0 0
      %1249 = vmatpush1.bf16.msra.mxu0 0
      %1250 = vmatprep.subr.bf16.mxu0 0
      %1251 = vmatpush1.bf16.msra.mxu0 0
      %1252 = vmatprep.subr.bf16.mxu0 0
      %1253 = vmatpush1.bf16.msra.mxu0 0
      %1254 = vmatprep.subr.bf16.mxu0 0
      %1255 = vmatpush1.bf16.msra.mxu0 0
      %1256 = vmatprep.subr.bf16.mxu0 0
      %1257 = vmatpush1.bf16.msra.mxu0 0
      %1258 = vmatprep.mubr.bf16.mxu0 0
      %1259 = vmatmul.mubr.bf16.gmra.mrb[0].mxu0 %v1101
      %v1260 = vpop.f32.mrb[0].mxu0
      %v1261 = vadd.f32 %v1087, %v1260
      %v1262 = vpop.f32.mrb[0].mxu0
      %v1263 = vadd.f32 %v1091, %v1262
      %v1264 = vpop.f32.mrb[0].mxu0
      %v1265 = vpop.f32.mrb[0].mxu0
      %1266 = vdwg.mxu0
      %v1267 = vld [vmem:[%s8] sm:$0xf]
      %v1268 = vld [vmem:[%s8 + $0x4] sm:$0xf]
      %v1269 = vld [vmem:[%s8 + $0x8] sm:$0xf]
      %v1270 = vld [vmem:[%s8 + $0xc] sm:$0xf]
      %v1271 = vld [vmem:[%s9] sm:$0x1]
      %v1273 = vlaneseq
      %v1274 = vshrl.u32 %v1273, 7
      %v1275 = vsub.s32 0, %v1274
      %v1276 = vrot.slane %v1271, %v1275
      %v1282 = vunpack.c.l.b16 %v1267
      %v1283 = vunpack.c.l.b16 %v1268
      %v1284 = vunpack.c.l.b16 %v1269
      %v1285 = vunpack.c.l.b16 %v1270
      %v1286 = vpack.c.b16 %v1283, %v1282
      %v1287 = vpack.c.b16 %v1285, %v1284
      %1290 = vmatprep.subr.bf16.mxu0 0
      %1291 = vmatpush1.bf16.msra.mxu0 %v1286
      %1292 = vmatprep.subr.bf16.mxu0 0
      %1293 = vmatpush1.bf16.msra.mxu0 %v1287
      %1294 = vmatprep.subr.bf16.mxu0 0
      %1295 = vmatpush1.bf16.msra.mxu0 0
      %1296 = vmatprep.subr.bf16.mxu0 0
      %1297 = vmatpush1.bf16.msra.mxu0 0
      %1298 = vmatprep.subr.bf16.mxu0 0
      %1299 = vmatpush1.bf16.msra.mxu0 0
      %1300 = vmatprep.subr.bf16.mxu0 0
      %1301 = vmatpush1.bf16.msra.mxu0 0
      %1302 = vmatprep.subr.bf16.mxu0 0
      %1303 = vmatpush1.bf16.msra.mxu0 0
      %1304 = vmatprep.subr.bf16.mxu0 0
      %1305 = vmatpush1.bf16.msra.mxu0 0
      %1306 = vmatprep.subr.bf16.mxu0 0
      %1307 = vmatpush1.bf16.msra.mxu0 0
      %1308 = vmatprep.subr.bf16.mxu0 0
      %1309 = vmatpush1.bf16.msra.mxu0 0
      %1310 = vmatprep.subr.bf16.mxu0 0
      %1311 = vmatpush1.bf16.msra.mxu0 0
      %1312 = vmatprep.subr.bf16.mxu0 0
      %1313 = vmatpush1.bf16.msra.mxu0 0
      %1314 = vmatprep.subr.bf16.mxu0 0
      %1315 = vmatpush1.bf16.msra.mxu0 0
      %1316 = vmatprep.subr.bf16.mxu0 0
      %1317 = vmatpush1.bf16.msra.mxu0 0
      %1318 = vmatprep.subr.bf16.mxu0 0
      %1319 = vmatpush1.bf16.msra.mxu0 0
      %1320 = vmatprep.subr.bf16.mxu0 0
      %1321 = vmatpush1.bf16.msra.mxu0 0
      %1322 = vmatprep.mubr.bf16.mxu0 0
      %1323 = vmatmul.mubr.bf16.gmra.mrb[0].mxu0 %v713
      %v1324 = vpop.f32.mrb[0].mxu0
      %v1325 = vadd.f32 %v1276, %v1324
      %v1326 = vpop.f32.mrb[0].mxu0
      %v1327 = vpop.f32.mrb[0].mxu0
      %v1328 = vadd.f32 %v1276, %v1327
      %v1329 = vpop.f32.mrb[0].mxu0
      %1330 = vdwg.mxu0
      %v1331 = vmul.f32 %v1325, %v1325
      %v1332 = vmul.f32 %v1328, %v1328
      %v1333 = vmul.f32 %v1325, %v1331
      %v1334 = vmul.f32 %v1328, %v1332
      %v1335 = vmul.f32 %v1333, 0.044715
      %v1336 = vmul.f32 %v1334, 0.044715
      %v1337 = vadd.f32 %v1325, %v1335
      %v1338 = vadd.f32 %v1328, %v1336
      %v1339 = vmul.f32 %v1337, 0.7978846
      %v1340 = vmul.f32 %v1338, 0.7978846
      %v1341 = vtanh.pop %v1339
      %v1342 = vtanh.pop %v1340
      %v1343 = vadd.f32 %v1341, 1.0
      %v1344 = vadd.f32 %v1342, 1.0
      %v1345 = vmul.f32 %v1343, 0.5
      %v1346 = vmul.f32 %v1344, 0.5
      %v1347 = vmul.f32 %v1325, %v1345
      %v1348 = vmul.f32 %v1328, %v1346
      %v1349 = vld [vmem:[%s10] sm:$0xf]
      %v1350 = vld [vmem:[%s10 + $0x4] sm:$0xf]
      %v1351 = vld [vmem:[%s10 + $0x8] sm:$0xf]
      %v1352 = vld [vmem:[%s10 + $0xc] sm:$0xf]
      %v1353 = vld [vmem:[%s11] sm:$0x1]
      %v1355 = vlaneseq
      %v1356 = vshrl.u32 %v1355, 7
      %v1357 = vsub.s32 0, %v1356
      %v1358 = vrot.slane %v1353, %v1357
      %v1361 = vrot.slane %v961, 1
      %v1366 = vunpack.c.l.b16 %v1349
      %v1367 = vunpack.c.l.b16 %v1350
      %v1368 = vunpack.c.l.b16 %v1351
      %v1369 = vunpack.c.l.b16 %v1352
      %v1370 = vpack.c.b16 %v1367, %v1366
      %v1371 = vpack.c.b16 %v1369, %v1368
      %v1375 = vsel %vm652, %v1361, 0
      %1377 = vmatprep.subr.bf16.mxu0 0
      %1378 = vmatpush1.bf16.msra.mxu0 %v1370
      %1379 = vmatprep.subr.bf16.mxu0 0
      %1380 = vmatpush1.bf16.msra.mxu0 %v1371
      %1381 = vmatprep.subr.bf16.mxu0 0
      %1382 = vmatpush1.bf16.msra.mxu0 0
      %1383 = vmatprep.subr.bf16.mxu0 0
      %1384 = vmatpush1.bf16.msra.mxu0 0
      %1385 = vmatprep.subr.bf16.mxu0 0
      %1386 = vmatpush1.bf16.msra.mxu0 0
      %1387 = vmatprep.subr.bf16.mxu0 0
      %1388 = vmatpush1.bf16.msra.mxu0 0
      %1389 = vmatprep.subr.bf16.mxu0 0
      %1390 = vmatpush1.bf16.msra.mxu0 0
      %1391 = vmatprep.subr.bf16.mxu0 0
      %1392 = vmatpush1.bf16.msra.mxu0 0
      %1393 = vmatprep.subr.bf16.mxu0 0
      %1394 = vmatpush1.bf16.msra.mxu0 0
      %1395 = vmatprep.subr.bf16.mxu0 0
      %1396 = vmatpush1.bf16.msra.mxu0 0
      %1397 = vmatprep.subr.bf16.mxu0 0
      %1398 = vmatpush1.bf16.msra.mxu0 0
      %1399 = vmatprep.subr.bf16.mxu0 0
      %1400 = vmatpush1.bf16.msra.mxu0 0
      %1401 = vmatprep.subr.bf16.mxu0 0
      %1402 = vmatpush1.bf16.msra.mxu0 0
      %1403 = vmatprep.subr.bf16.mxu0 0
      %1404 = vmatpush1.bf16.msra.mxu0 0
      %1405 = vmatprep.subr.bf16.mxu0 0
      %1406 = vmatpush1.bf16.msra.mxu0 0
      %1407 = vmatprep.subr.bf16.mxu0 0
      %1408 = vmatpush1.bf16.msra.mxu0 0
      %1409 = vmatprep.mubr.bf16.mxu0 0
      %1410 = vmatmul.mubr.bf16.gmra.mrb[0].mxu0 %v1375
      %v1411 = vpop.f32.mrb[0].mxu0
      %v1412 = vadd.f32 %v1358, %v1411
      %v1413 = vpop.f32.mrb[0].mxu0
      %v1414 = vpop.f32.mrb[0].mxu0
      %v1415 = vpop.f32.mrb[0].mxu0
      %1416 = vdwg.mxu0
      %1419 = vrot.lane.b32.xlu0 %v1347, 124
      %v1420 = vpop.permute.xlu0 %1419
      %1421 = vrot.lane.b32.xlu0 %v1348, 124
      %v1422 = vpop.permute.xlu0 %1421
      %1423 = vrot.lane.b32.xlu0 %v1347, 120
      %v1424 = vpop.permute.xlu0 %1423
      %1425 = vrot.lane.b32.xlu0 %v1348, 120
      %v1426 = vpop.permute.xlu0 %1425
      %1427 = vrot.lane.b32.xlu0 %v1347, 116
      %v1428 = vpop.permute.xlu0 %1427
      %1429 = vrot.lane.b32.xlu0 %v1348, 116
      %v1430 = vpop.permute.xlu0 %1429
      %1431 = vrot.lane.b32.xlu0 %v1347, 112
      %v1432 = vpop.permute.xlu0 %1431
      %1433 = vrot.lane.b32.xlu0 %v1348, 112
      %v1434 = vpop.permute.xlu0 %1433
      %1435 = vrot.lane.b32.xlu0 %v1347, 108
      %v1436 = vpop.permute.xlu0 %1435
      %1437 = vrot.lane.b32.xlu0 %v1348, 108
      %v1438 = vpop.permute.xlu0 %1437
      %1439 = vrot.lane.b32.xlu0 %v1347, 104
      %v1440 = vpop.permute.xlu0 %1439
      %1441 = vrot.lane.b32.xlu0 %v1348, 104
      %v1442 = vpop.permute.xlu0 %1441
      %1443 = vrot.lane.b32.xlu0 %v1347, 100
      %v1444 = vpop.permute.xlu0 %1443
      %1445 = vrot.lane.b32.xlu0 %v1348, 100
      %v1446 = vpop.permute.xlu0 %1445
      %1447 = vrot.lane.b32.xlu0 %v1347, 96
      %v1448 = vpop.permute.xlu0 %1447
      %1449 = vrot.lane.b32.xlu0 %v1348, 96
      %v1450 = vpop.permute.xlu0 %1449
      %1451 = vrot.lane.b32.xlu0 %v1347, 92
      %v1452 = vpop.permute.xlu0 %1451
      %1453 = vrot.lane.b32.xlu0 %v1348, 92
      %v1454 = vpop.permute.xlu0 %1453
      %1455 = vrot.lane.b32.xlu0 %v1347, 88
      %v1456 = vpop.permute.xlu0 %1455
      %1457 = vrot.lane.b32.xlu0 %v1348, 88
      %v1458 = vpop.permute.xlu0 %1457
      %1459 = vrot.lane.b32.xlu0 %v1347, 84
      %v1460 = vpop.permute.xlu0 %1459
      %1461 = vrot.lane.b32.xlu0 %v1348, 84
      %v1462 = vpop.permute.xlu0 %1461
      %1463 = vrot.lane.b32.xlu0 %v1347, 80
      %v1464 = vpop.permute.xlu0 %1463
      %1465 = vrot.lane.b32.xlu0 %v1348, 80
      %v1466 = vpop.permute.xlu0 %1465
      %1467 = vrot.lane.b32.xlu0 %v1347, 76
      %v1468 = vpop.permute.xlu0 %1467
      %1469 = vrot.lane.b32.xlu0 %v1348, 76
      %v1470 = vpop.permute.xlu0 %1469
      %1471 = vrot.lane.b32.xlu0 %v1347, 72
      %v1472 = vpop.permute.xlu0 %1471
      %1473 = vrot.lane.b32.xlu0 %v1348, 72
      %v1474 = vpop.permute.xlu0 %1473
      %1475 = vrot.lane.b32.xlu0 %v1347, 68
      %v1476 = vpop.permute.xlu0 %1475
      %1477 = vrot.lane.b32.xlu0 %v1348, 68
      %v1478 = vpop.permute.xlu0 %1477
      %vm1479 = vcmask 31744
      %v1481 = vsel %vm1479, %v1412, 0
      %v1483 = vsel %vm1479, %v1347, 0
      %v1485 = vsel %vm1479, %v1348, 0
      %v1487 = vsel %vm1479, %v1420, 0
      %v1489 = vsel %vm1479, %v1422, 0
      %v1491 = vsel %vm1479, %v1424, 0
      %v1493 = vsel %vm1479, %v1426, 0
      %v1495 = vsel %vm1479, %v1428, 0
      %v1497 = vsel %vm1479, %v1430, 0
      %v1499 = vsel %vm1479, %v1432, 0
      %v1501 = vsel %vm1479, %v1434, 0
      %v1503 = vsel %vm1479, %v1436, 0
      %v1505 = vsel %vm1479, %v1438, 0
      %v1507 = vsel %vm1479, %v1440, 0
      %v1509 = vsel %vm1479, %v1442, 0
      %v1511 = vsel %vm1479, %v1444, 0
      %v1513 = vsel %vm1479, %v1446, 0
      %v1515 = vsel %vm1479, %v1448, 0
      %v1517 = vsel %vm1479, %v1450, 0
      %v1519 = vsel %vm1479, %v1452, 0
      %v1521 = vsel %vm1479, %v1454, 0
      %v1523 = vsel %vm1479, %v1456, 0
      %v1525 = vsel %vm1479, %v1458, 0
      %v1527 = vsel %vm1479, %v1460, 0
      %v1529 = vsel %vm1479, %v1462, 0
      %v1531 = vsel %vm1479, %v1464, 0
      %v1533 = vsel %vm1479, %v1466, 0
      %v1535 = vsel %vm1479, %v1468, 0
      %v1537 = vsel %vm1479, %v1470, 0
      %v1539 = vsel %vm1479, %v1472, 0
      %v1541 = vsel %vm1479, %v1474, 0
      %v1543 = vsel %vm1479, %v1476, 0
      %v1545 = vsel %vm1479, %v1478, 0
      %1547 = vmatprep.subr.mxu0 0.0
      %1548 = vmatpush1.xpose.msra.mxu0 %v1483
      %1549 = vmatprep.subr.mxu0 0.0
      %1550 = vmatpush1.xpose.msra.mxu0 %v1485
      %1551 = vmatprep.subr.mxu0 0.0
      %1552 = vmatpush1.xpose.msra.mxu0 %v1487
      %1553 = vmatprep.subr.mxu0 0.0
      %1554 = vmatpush1.xpose.msra.mxu0 %v1489
      %1555 = vmatprep.subr.mxu0 0.0
      %1556 = vmatpush1.xpose.msra.mxu0 %v1491
      %1557 = vmatprep.subr.mxu0 0.0
      %1558 = vmatpush1.xpose.msra.mxu0 %v1493
      %1559 = vmatprep.subr.mxu0 0.0
      %1560 = vmatpush1.xpose.msra.mxu0 %v1495
      %1561 = vmatprep.subr.mxu0 0.0
      %1562 = vmatpush1.xpose.msra.mxu0 %v1497
      %1563 = vmatprep.subr.mxu0 0.0
      %1564 = vmatpush1.xpose.msra.mxu0 %v1499
      %1565 = vmatprep.subr.mxu0 0.0
      %1566 = vmatpush1.xpose.msra.mxu0 %v1501
      %1567 = vmatprep.subr.mxu0 0.0
      %1568 = vmatpush1.xpose.msra.mxu0 %v1503
      %1569 = vmatprep.subr.mxu0 0.0
      %1570 = vmatpush1.xpose.msra.mxu0 %v1505
      %1571 = vmatprep.subr.mxu0 0.0
      %1572 = vmatpush1.xpose.msra.mxu0 %v1507
      %1573 = vmatprep.subr.mxu0 0.0
      %1574 = vmatpush1.xpose.msra.mxu0 %v1509
      %1575 = vmatprep.subr.mxu0 0.0
      %1576 = vmatpush1.xpose.msra.mxu0 %v1511
      %1577 = vmatprep.subr.mxu0 0.0
      %1578 = vmatpush1.xpose.msra.mxu0 %v1513
      %1579 = vmatprep.subr.mxu0 0.0
      %1580 = vmatpush1.xpose.msra.mxu0 %v1515
      %1581 = vmatprep.subr.mxu0 0.0
      %1582 = vmatpush1.xpose.msra.mxu0 %v1517
      %1583 = vmatprep.subr.mxu0 0.0
      %1584 = vmatpush1.xpose.msra.mxu0 %v1519
      %1585 = vmatprep.subr.mxu0 0.0
      %1586 = vmatpush1.xpose.msra.mxu0 %v1521
      %1587 = vmatprep.subr.mxu0 0.0
      %1588 = vmatpush1.xpose.msra.mxu0 %v1523
      %1589 = vmatprep.subr.mxu0 0.0
      %1590 = vmatpush1.xpose.msra.mxu0 %v1525
      %1591 = vmatprep.subr.mxu0 0.0
      %1592 = vmatpush1.xpose.msra.mxu0 %v1527
      %1593 = vmatprep.subr.mxu0 0.0
      %1594 = vmatpush1.xpose.msra.mxu0 %v1529
      %1595 = vmatprep.subr.mxu0 0.0
      %1596 = vmatpush1.xpose.msra.mxu0 %v1531
      %1597 = vmatprep.subr.mxu0 0.0
      %1598 = vmatpush1.xpose.msra.mxu0 %v1533
      %1599 = vmatprep.subr.mxu0 0.0
      %1600 = vmatpush1.xpose.msra.mxu0 %v1535
      %1601 = vmatprep.subr.mxu0 0.0
      %1602 = vmatpush1.xpose.msra.mxu0 %v1537
      %1603 = vmatprep.subr.mxu0 0.0
      %1604 = vmatpush1.xpose.msra.mxu0 %v1539
      %1605 = vmatprep.subr.mxu0 0.0
      %1606 = vmatpush1.xpose.msra.mxu0 %v1541
      %1607 = vmatprep.subr.mxu0 0.0
      %1608 = vmatpush1.xpose.msra.mxu0 %v1543
      %1609 = vmatprep.subr.mxu0 0.0
      %1610 = vmatpush1.xpose.msra.mxu0 %v1545
      %1611 = vmatprep.mubr.f32.mxu0 0.0
      %1612 = vmatmul.mubr.f32.gmra.mrb[0].mxu0 %v1481
      %v1613 = vpop.f32.mrb[0].mxu0
      %v1614 = vadd.f32 0.0, %v1613
      %v1615 = vpop.f32.mrb[0].mxu0
      %v1616 = vadd.f32 0.0, %v1615
      %1617 = vdwg.mxu0
      %v1618 = vpack.c.bf16 %v1614, %v1614
      %v1619 = vpack.c.bf16 %v1616, %v1616
      %v1620 = vld [vmem:[%s14] sm:$0xff]
      %v1621 = vld [vmem:[%s14 + $0x8] sm:$0xff]
      %v1622 = vld [vmem:[%s14 + $0x10] sm:$0xff]
      %v1623 = vld [vmem:[%s14 + $0x18] sm:$0xff]
      %v1624 = vld [vmem:[%s14 + $0x20] sm:$0xff]
      %v1625 = vld [vmem:[%s14 + $0x28] sm:$0xff]
      %v1626 = vld [vmem:[%s14 + $0x30] sm:$0xff]
      %v1627 = vld [vmem:[%s14 + $0x38] sm:$0xff]
      %v1628 = vld [vmem:[%s14 + $0x40] sm:$0xff]
      %v1629 = vld [vmem:[%s14 + $0x48] sm:$0xff]
      %v1630 = vld [vmem:[%s14 + $0x50] sm:$0xff]
      %v1631 = vld [vmem:[%s14 + $0x58] sm:$0xff]
      %v1632 = vld [vmem:[%s14 + $0x60] sm:$0xff]
      %v1633 = vld [vmem:[%s14 + $0x68] sm:$0xff]
      %v1634 = vld [vmem:[%s14 + $0x70] sm:$0xff]
      %v1635 = vld [vmem:[%s14 + $0x78] sm:$0xff]
      %v1636 = vld [vmem:[%s14 + $0x80] sm:$0xff]
      %v1637 = vld [vmem:[%s14 + $0x88] sm:$0xff]
      %v1638 = vld [vmem:[%s14 + $0x90] sm:$0xff]
      %v1639 = vld [vmem:[%s14 + $0x98] sm:$0xff]
      %v1640 = vld [vmem:[%s14 + $0xa0] sm:$0xff]
      %v1641 = vld [vmem:[%s14 + $0xa8] sm:$0xff]
      %v1642 = vld [vmem:[%s14 + $0xb0] sm:$0xff]
      %v1643 = vld [vmem:[%s14 + $0xb8] sm:$0xff]
      %v1644 = vld [vmem:[%s14 + $0xc0] sm:$0xff]
      %v1645 = vld [vmem:[%s14 + $0xc8] sm:$0xff]
      %v1646 = vld [vmem:[%s14 + $0xd0] sm:$0xff]
      %v1647 = vld [vmem:[%s14 + $0xd8] sm:$0xff]
      %v1648 = vld [vmem:[%s14 + $0xe0] sm:$0xff]
      %v1649 = vld [vmem:[%s14 + $0xe8] sm:$0xff]
      %v1650 = vld [vmem:[%s14 + $0xf0] sm:$0xff]
      %v1651 = vld [vmem:[%s14 + $0xf8] sm:$0xff]
      %v1652 = vld [vmem:[%s14 + $0x100] sm:$0xff]
      %v1653 = vld [vmem:[%s14 + $0x108] sm:$0xff]
      %v1654 = vld [vmem:[%s14 + $0x110] sm:$0xff]
      %v1655 = vld [vmem:[%s14 + $0x118] sm:$0xff]
      %v1656 = vld [vmem:[%s14 + $0x120] sm:$0xff]
      %v1657 = vld [vmem:[%s14 + $0x128] sm:$0xff]
      %v1658 = vld [vmem:[%s14 + $0x130] sm:$0xff]
      %v1659 = vld [vmem:[%s14 + $0x138] sm:$0xff]
      %v1660 = vld [vmem:[%s14 + $0x140] sm:$0xff]
      %v1661 = vld [vmem:[%s14 + $0x148] sm:$0xff]
      %v1662 = vld [vmem:[%s14 + $0x150] sm:$0xff]
      %v1663 = vld [vmem:[%s14 + $0x158] sm:$0xff]
      %v1664 = vld [vmem:[%s14 + $0x160] sm:$0xff]
      %v1665 = vld [vmem:[%s14 + $0x168] sm:$0xff]
      %v1666 = vld [vmem:[%s14 + $0x170] sm:$0xff]
      %v1667 = vld [vmem:[%s14 + $0x178] sm:$0xff]
      %v1668 = vld [vmem:[%s14 + $0x180] sm:$0xff]
      %v1669 = vld [vmem:[%s14 + $0x188] sm:$0xff]
      %v1670 = vld [vmem:[%s14 + $0x190] sm:$0xff]
      %v1671 = vld [vmem:[%s14 + $0x198] sm:$0xff]
      %v1672 = vld [vmem:[%s14 + $0x1a0] sm:$0xff]
      %v1673 = vld [vmem:[%s14 + $0x1a8] sm:$0xff]
      %v1674 = vld [vmem:[%s14 + $0x1b0] sm:$0xff]
      %v1675 = vld [vmem:[%s14 + $0x1b8] sm:$0xff]
      %v1676 = vld [vmem:[%s14 + $0x1c0] sm:$0xff]
      %v1677 = vld [vmem:[%s14 + $0x1c8] sm:$0xff]
      %v1678 = vld [vmem:[%s14 + $0x1d0] sm:$0xff]
      %v1679 = vld [vmem:[%s14 + $0x1d8] sm:$0xff]
      %v1680 = vld [vmem:[%s14 + $0x1e0] sm:$0xff]
      %v1681 = vld [vmem:[%s14 + $0x1e8] sm:$0xff]
      %v1682 = vld [vmem:[%s14 + $0x1f0] sm:$0xff]
      %v1683 = vld [vmem:[%s14 + $0x1f8] sm:$0xff]
      %v1684 = vld [vmem:[%s14 + $0x200] sm:$0xff]
      %v1685 = vld [vmem:[%s14 + $0x208] sm:$0xff]
      %v1686 = vld [vmem:[%s14 + $0x210] sm:$0xff]
      %v1687 = vld [vmem:[%s14 + $0x218] sm:$0xff]
      %v1688 = vld [vmem:[%s14 + $0x220] sm:$0xff]
      %v1689 = vld [vmem:[%s14 + $0x228] sm:$0xff]
      %v1690 = vld [vmem:[%s14 + $0x230] sm:$0xff]
      %v1691 = vld [vmem:[%s14 + $0x238] sm:$0xff]
      %v1692 = vld [vmem:[%s14 + $0x240] sm:$0xff]
      %v1693 = vld [vmem:[%s14 + $0x248] sm:$0xff]
      %v1694 = vld [vmem:[%s14 + $0x250] sm:$0xff]
      %v1695 = vld [vmem:[%s14 + $0x258] sm:$0xff]
      %v1696 = vld [vmem:[%s14 + $0x260] sm:$0xff]
      %v1697 = vld [vmem:[%s14 + $0x268] sm:$0xff]
      %v1698 = vld [vmem:[%s14 + $0x270] sm:$0xff]
      %v1699 = vld [vmem:[%s14 + $0x278] sm:$0xff]
      %v1700 = vld [vmem:[%s14 + $0x280] sm:$0xff]
      %v1701 = vld [vmem:[%s14 + $0x288] sm:$0xff]
      %v1702 = vld [vmem:[%s14 + $0x290] sm:$0xff]
      %v1703 = vld [vmem:[%s14 + $0x298] sm:$0xff]
      %v1704 = vld [vmem:[%s14 + $0x2a0] sm:$0xff]
      %v1705 = vld [vmem:[%s14 + $0x2a8] sm:$0xff]
      %v1706 = vld [vmem:[%s14 + $0x2b0] sm:$0xff]
      %v1707 = vld [vmem:[%s14 + $0x2b8] sm:$0xff]
      %v1708 = vld [vmem:[%s14 + $0x2c0] sm:$0xff]
      %v1709 = vld [vmem:[%s14 + $0x2c8] sm:$0xff]
      %v1710 = vld [vmem:[%s14 + $0x2d0] sm:$0xff]
      %v1711 = vld [vmem:[%s14 + $0x2d8] sm:$0xff]
      %v1712 = vld [vmem:[%s14 + $0x2e0] sm:$0xff]
      %v1713 = vld [vmem:[%s14 + $0x2e8] sm:$0xff]
      %v1714 = vld [vmem:[%s14 + $0x2f0] sm:$0xff]
      %v1715 = vld [vmem:[%s14 + $0x2f8] sm:$0xff]
      %v1716 = vld [vmem:[%s14 + $0x300] sm:$0xff]
      %v1717 = vld [vmem:[%s14 + $0x308] sm:$0xff]
      %v1718 = vld [vmem:[%s14 + $0x310] sm:$0xff]
      %v1719 = vld [vmem:[%s14 + $0x318] sm:$0xff]
      %v1720 = vld [vmem:[%s14 + $0x320] sm:$0xff]
      %v1721 = vld [vmem:[%s14 + $0x328] sm:$0xff]
      %v1722 = vld [vmem:[%s14 + $0x330] sm:$0xff]
      %v1723 = vld [vmem:[%s14 + $0x338] sm:$0xff]
      %v1724 = vld [vmem:[%s14 + $0x340] sm:$0xff]
      %v1725 = vld [vmem:[%s14 + $0x348] sm:$0xff]
      %v1726 = vld [vmem:[%s14 + $0x350] sm:$0xff]
      %v1727 = vld [vmem:[%s14 + $0x358] sm:$0xff]
      %v1728 = vld [vmem:[%s14 + $0x360] sm:$0xff]
      %v1729 = vld [vmem:[%s14 + $0x368] sm:$0xff]
      %v1730 = vld [vmem:[%s14 + $0x370] sm:$0xff]
      %v1731 = vld [vmem:[%s14 + $0x378] sm:$0xff]
      %v1732 = vld [vmem:[%s14 + $0x380] sm:$0xff]
      %v1733 = vld [vmem:[%s14 + $0x388] sm:$0xff]
      %v1734 = vld [vmem:[%s14 + $0x390] sm:$0xff]
      %v1735 = vld [vmem:[%s14 + $0x398] sm:$0xff]
      %v1736 = vld [vmem:[%s14 + $0x3a0] sm:$0xff]
      %v1737 = vld [vmem:[%s14 + $0x3a8] sm:$0xff]
      %v1738 = vld [vmem:[%s14 + $0x3b0] sm:$0xff]
      %v1739 = vld [vmem:[%s14 + $0x3b8] sm:$0xff]
      %v1740 = vld [vmem:[%s14 + $0x3c0] sm:$0xff]
      %v1741 = vld [vmem:[%s14 + $0x3c8] sm:$0xff]
      %v1742 = vld [vmem:[%s14 + $0x3d0] sm:$0xff]
      %v1743 = vld [vmem:[%s14 + $0x3d8] sm:$0xff]
      %v1744 = vld [vmem:[%s14 + $0x3e0] sm:$0xff]
      %v1745 = vld [vmem:[%s14 + $0x3e8] sm:$0xff]
      %v1746 = vld [vmem:[%s14 + $0x3f0] sm:$0xff]
      %v1747 = vld [vmem:[%s14 + $0x3f8] sm:$0xff]
      %v1876 = vunpack.c.l.b16 %v1620
      %v1877 = vunpack.c.h.b16 %v1620
      %v1878 = vunpack.c.l.b16 %v1621
      %v1879 = vunpack.c.h.b16 %v1621
      %v1880 = vunpack.c.l.b16 %v1622
      %v1881 = vunpack.c.h.b16 %v1622
      %v1882 = vunpack.c.l.b16 %v1623
      %v1883 = vunpack.c.h.b16 %v1623
      %v1884 = vunpack.c.l.b16 %v1624
      %v1885 = vunpack.c.h.b16 %v1624
      %v1886 = vunpack.c.l.b16 %v1625
      %v1887 = vunpack.c.h.b16 %v1625
      %v1888 = vunpack.c.l.b16 %v1626
      %v1889 = vunpack.c.h.b16 %v1626
      %v1890 = vunpack.c.l.b16 %v1627
      %v1891 = vunpack.c.h.b16 %v1627
      %v1892 = vunpack.c.l.b16 %v1628
      %v1893 = vunpack.c.h.b16 %v1628
      %v1894 = vunpack.c.l.b16 %v1629
      %v1895 = vunpack.c.h.b16 %v1629
      %v1896 = vunpack.c.l.b16 %v1630
      %v1897 = vunpack.c.h.b16 %v1630
      %v1898 = vunpack.c.l.b16 %v1631
      %v1899 = vunpack.c.h.b16 %v1631
      %v1900 = vunpack.c.l.b16 %v1632
      %v1901 = vunpack.c.h.b16 %v1632
      %v1902 = vunpack.c.l.b16 %v1633
      %v1903 = vunpack.c.h.b16 %v1633
      %v1904 = vunpack.c.l.b16 %v1634
      %v1905 = vunpack.c.h.b16 %v1634
      %v1906 = vunpack.c.l.b16 %v1635
      %v1907 = vunpack.c.h.b16 %v1635
      %v1908 = vunpack.c.l.b16 %v1636
      %v1909 = vunpack.c.h.b16 %v1636
      %v1910 = vunpack.c.l.b16 %v1637
      %v1911 = vunpack.c.h.b16 %v1637
      %v1912 = vunpack.c.l.b16 %v1638
      %v1913 = vunpack.c.h.b16 %v1638
      %v1914 = vunpack.c.l.b16 %v1639
      %v1915 = vunpack.c.h.b16 %v1639
      %v1916 = vunpack.c.l.b16 %v1640
      %v1917 = vunpack.c.h.b16 %v1640
      %v1918 = vunpack.c.l.b16 %v1641
      %v1919 = vunpack.c.h.b16 %v1641
      %v1920 = vunpack.c.l.b16 %v1642
      %v1921 = vunpack.c.h.b16 %v1642
      %v1922 = vunpack.c.l.b16 %v1643
      %v1923 = vunpack.c.h.b16 %v1643
      %v1924 = vunpack.c.l.b16 %v1644
      %v1925 = vunpack.c.h.b16 %v1644
      %v1926 = vunpack.c.l.b16 %v1645
      %v1927 = vunpack.c.h.b16 %v1645
      %v1928 = vunpack.c.l.b16 %v1646
      %v1929 = vunpack.c.h.b16 %v1646
      %v1930 = vunpack.c.l.b16 %v1647
      %v1931 = vunpack.c.h.b16 %v1647
      %v1932 = vunpack.c.l.b16 %v1648
      %v1933 = vunpack.c.h.b16 %v1648
      %v1934 = vunpack.c.l.b16 %v1649
      %v1935 = vunpack.c.h.b16 %v1649
      %v1936 = vunpack.c.l.b16 %v1650
      %v1937 = vunpack.c.h.b16 %v1650
      %v1938 = vunpack.c.l.b16 %v1651
      %v1939 = vunpack.c.h.b16 %v1651
      %v1940 = vunpack.c.l.b16 %v1652
      %v1941 = vunpack.c.h.b16 %v1652
      %v1942 = vunpack.c.l.b16 %v1653
      %v1943 = vunpack.c.h.b16 %v1653
      %v1944 = vunpack.c.l.b16 %v1654
      %v1945 = vunpack.c.h.b16 %v1654
      %v1946 = vunpack.c.l.b16 %v1655
      %v1947 = vunpack.c.h.b16 %v1655
      %v1948 = vunpack.c.l.b16 %v1656
      %v1949 = vunpack.c.h.b16 %v1656
      %v1950 = vunpack.c.l.b16 %v1657
      %v1951 = vunpack.c.h.b16 %v1657
      %v1952 = vunpack.c.l.b16 %v1658
      %v1953 = vunpack.c.h.b16 %v1658
      %v1954 = vunpack.c.l.b16 %v1659
      %v1955 = vunpack.c.h.b16 %v1659
      %v1956 = vunpack.c.l.b16 %v1660
      %v1957 = vunpack.c.h.b16 %v1660
      %v1958 = vunpack.c.l.b16 %v1661
      %v1959 = vunpack.c.h.b16 %v1661
      %v1960 = vunpack.c.l.b16 %v1662
      %v1961 = vunpack.c.h.b16 %v1662
      %v1962 = vunpack.c.l.b16 %v1663
      %v1963 = vunpack.c.h.b16 %v1663
      %v1964 = vunpack.c.l.b16 %v1664
      %v1965 = vunpack.c.h.b16 %v1664
      %v1966 = vunpack.c.l.b16 %v1665
      %v1967 = vunpack.c.h.b16 %v1665
      %v1968 = vunpack.c.l.b16 %v1666
      %v1969 = vunpack.c.h.b16 %v1666
      %v1970 = vunpack.c.l.b16 %v1667
      %v1971 = vunpack.c.h.b16 %v1667
      %v1972 = vunpack.c.l.b16 %v1668
      %v1973 = vunpack.c.h.b16 %v1668
      %v1974 = vunpack.c.l.b16 %v1669
      %v1975 = vunpack.c.h.b16 %v1669
      %v1976 = vunpack.c.l.b16 %v1670
      %v1977 = vunpack.c.h.b16 %v1670
      %v1978 = vunpack.c.l.b16 %v1671
      %v1979 = vunpack.c.h.b16 %v1671
      %v1980 = vunpack.c.l.b16 %v1672
      %v1981 = vunpack.c.h.b16 %v1672
      %v1982 = vunpack.c.l.b16 %v1673
      %v1983 = vunpack.c.h.b16 %v1673
      %v1984 = vunpack.c.l.b16 %v1674
      %v1985 = vunpack.c.h.b16 %v1674
      %v1986 = vunpack.c.l.b16 %v1675
      %v1987 = vunpack.c.h.b16 %v1675
      %v1988 = vunpack.c.l.b16 %v1676
      %v1989 = vunpack.c.h.b16 %v1676
      %v1990 = vunpack.c.l.b16 %v1677
      %v1991 = vunpack.c.h.b16 %v1677
      %v1992 = vunpack.c.l.b16 %v1678
      %v1993 = vunpack.c.h.b16 %v1678
      %v1994 = vunpack.c.l.b16 %v1679
      %v1995 = vunpack.c.h.b16 %v1679
      %v1996 = vunpack.c.l.b16 %v1680
      %v1997 = vunpack.c.h.b16 %v1680
      %v1998 = vunpack.c.l.b16 %v1681
      %v1999 = vunpack.c.h.b16 %v1681
      %v2000 = vunpack.c.l.b16 %v1682
      %v2001 = vunpack.c.h.b16 %v1682
      %v2002 = vunpack.c.l.b16 %v1683
      %v2003 = vunpack.c.h.b16 %v1683
      %v2004 = vunpack.c.l.b16 %v1684
      %v2005 = vunpack.c.h.b16 %v1684
      %v2006 = vunpack.c.l.b16 %v1685
      %v2007 = vunpack.c.h.b16 %v1685
      %v2008 = vunpack.c.l.b16 %v1686
      %v2009 = vunpack.c.h.b16 %v1686
      %v2010 = vunpack.c.l.b16 %v1687
      %v2011 = vunpack.c.h.b16 %v1687
      %v2012 = vunpack.c.l.b16 %v1688
      %v2013 = vunpack.c.h.b16 %v1688
      %v2014 = vunpack.c.l.b16 %v1689
      %v2015 = vunpack.c.h.b16 %v1689
      %v2016 = vunpack.c.l.b16 %v1690
      %v2017 = vunpack.c.h.b16 %v1690
      %v2018 = vunpack.c.l.b16 %v1691
      %v2019 = vunpack.c.h.b16 %v1691
      %v2020 = vunpack.c.l.b16 %v1692
      %v2021 = vunpack.c.h.b16 %v1692
      %v2022 = vunpack.c.l.b16 %v1693
      %v2023 = vunpack.c.h.b16 %v1693
      %v2024 = vunpack.c.l.b16 %v1694
      %v2025 = vunpack.c.h.b16 %v1694
      %v2026 = vunpack.c.l.b16 %v1695
      %v2027 = vunpack.c.h.b16 %v1695
      %v2028 = vunpack.c.l.b16 %v1696
      %v2029 = vunpack.c.h.b16 %v1696
      %v2030 = vunpack.c.l.b16 %v1697
      %v2031 = vunpack.c.h.b16 %v1697
      %v2032 = vunpack.c.l.b16 %v1698
      %v2033 = vunpack.c.h.b16 %v1698
      %v2034 = vunpack.c.l.b16 %v1699
      %v2035 = vunpack.c.h.b16 %v1699
      %v2036 = vunpack.c.l.b16 %v1700
      %v2037 = vunpack.c.h.b16 %v1700
      %v2038 = vunpack.c.l.b16 %v1701
      %v2039 = vunpack.c.h.b16 %v1701
      %v2040 = vunpack.c.l.b16 %v1702
      %v2041 = vunpack.c.h.b16 %v1702
      %v2042 = vunpack.c.l.b16 %v1703
      %v2043 = vunpack.c.h.b16 %v1703
      %v2044 = vunpack.c.l.b16 %v1704
      %v2045 = vunpack.c.h.b16 %v1704
      %v2046 = vunpack.c.l.b16 %v1705
      %v2047 = vunpack.c.h.b16 %v1705
      %v2048 = vunpack.c.l.b16 %v1706
      %v2049 = vunpack.c.h.b16 %v1706
      %v2050 = vunpack.c.l.b16 %v1707
      %v2051 = vunpack.c.h.b16 %v1707
      %v2052 = vunpack.c.l.b16 %v1708
      %v2053 = vunpack.c.h.b16 %v1708
      %v2054 = vunpack.c.l.b16 %v1709
      %v2055 = vunpack.c.h.b16 %v1709
      %v2056 = vunpack.c.l.b16 %v1710
      %v2057 = vunpack.c.h.b16 %v1710
      %v2058 = vunpack.c.l.b16 %v1711
      %v2059 = vunpack.c.h.b16 %v1711
      %v2060 = vunpack.c.l.b16 %v1712
      %v2061 = vunpack.c.h.b16 %v1712
      %v2062 = vunpack.c.l.b16 %v1713
      %v2063 = vunpack.c.h.b16 %v1713
      %v2064 = vunpack.c.l.b16 %v1714
      %v2065 = vunpack.c.h.b16 %v1714
      %v2066 = vunpack.c.l.b16 %v1715
      %v2067 = vunpack.c.h.b16 %v1715
      %v2068 = vunpack.c.l.b16 %v1716
      %v2069 = vunpack.c.h.b16 %v1716
      %v2070 = vunpack.c.l.b16 %v1717
      %v2071 = vunpack.c.h.b16 %v1717
      %v2072 = vunpack.c.l.b16 %v1718
      %v2073 = vunpack.c.h.b16 %v1718
      %v2074 = vunpack.c.l.b16 %v1719
      %v2075 = vunpack.c.h.b16 %v1719
      %v2076 = vunpack.c.l.b16 %v1720
      %v2077 = vunpack.c.h.b16 %v1720
      %v2078 = vunpack.c.l.b16 %v1721
      %v2079 = vunpack.c.h.b16 %v1721
      %v2080 = vunpack.c.l.b16 %v1722
      %v2081 = vunpack.c.h.b16 %v1722
      %v2082 = vunpack.c.l.b16 %v1723
      %v2083 = vunpack.c.h.b16 %v1723
      %v2084 = vunpack.c.l.b16 %v1724
      %v2085 = vunpack.c.h.b16 %v1724
      %v2086 = vunpack.c.l.b16 %v1725
      %v2087 = vunpack.c.h.b16 %v1725
      %v2088 = vunpack.c.l.b16 %v1726
      %v2089 = vunpack.c.h.b16 %v1726
      %v2090 = vunpack.c.l.b16 %v1727
      %v2091 = vunpack.c.h.b16 %v1727
      %v2092 = vunpack.c.l.b16 %v1728
      %v2093 = vunpack.c.h.b16 %v1728
      %v2094 = vunpack.c.l.b16 %v1729
      %v2095 = vunpack.c.h.b16 %v1729
      %v2096 = vunpack.c.l.b16 %v1730
      %v2097 = vunpack.c.h.b16 %v1730
      %v2098 = vunpack.c.l.b16 %v1731
      %v2099 = vunpack.c.h.b16 %v1731
      %v2100 = vunpack.c.l.b16 %v1732
      %v2101 = vunpack.c.h.b16 %v1732
      %v2102 = vunpack.c.l.b16 %v1733
      %v2103 = vunpack.c.h.b16 %v1733
      %v2104 = vunpack.c.l.b16 %v1734
      %v2105 = vunpack.c.h.b16 %v1734
      %v2106 = vunpack.c.l.b16 %v1735
      %v2107 = vunpack.c.h.b16 %v1735
      %v2108 = vunpack.c.l.b16 %v1736
      %v2109 = vunpack.c.h.b16 %v1736
      %v2110 = vunpack.c.l.b16 %v1737
      %v2111 = vunpack.c.h.b16 %v1737
      %v2112 = vunpack.c.l.b16 %v1738
      %v2113 = vunpack.c.h.b16 %v1738
      %v2114 = vunpack.c.l.b16 %v1739
      %v2115 = vunpack.c.h.b16 %v1739
      %v2116 = vunpack.c.l.b16 %v1740
      %v2117 = vunpack.c.h.b16 %v1740
      %v2118 = vunpack.c.l.b16 %v1741
      %v2119 = vunpack.c.h.b16 %v1741
      %v2120 = vunpack.c.l.b16 %v1742
      %v2121 = vunpack.c.h.b16 %v1742
      %v2122 = vunpack.c.l.b16 %v1743
      %v2123 = vunpack.c.h.b16 %v1743
      %v2124 = vunpack.c.l.b16 %v1744
      %v2125 = vunpack.c.h.b16 %v1744
      %v2126 = vunpack.c.l.b16 %v1745
      %v2127 = vunpack.c.h.b16 %v1745
      %v2128 = vunpack.c.l.b16 %v1746
      %v2129 = vunpack.c.h.b16 %v1746
      %v2130 = vunpack.c.l.b16 %v1747
      %v2131 = vunpack.c.h.b16 %v1747
      %v2132 = vpack.c.b16 %v1884, %v1876
      %v2133 = vpack.c.b16 %v1885, %v1877
      %v2134 = vpack.c.b16 %v1886, %v1878
      %v2135 = vpack.c.b16 %v1887, %v1879
      %v2136 = vpack.c.b16 %v1888, %v1880
      %v2137 = vpack.c.b16 %v1889, %v1881
      %v2138 = vpack.c.b16 %v1890, %v1882
      %v2139 = vpack.c.b16 %v1891, %v1883
      %v2140 = vpack.c.b16 %v1900, %v1892
      %v2141 = vpack.c.b16 %v1901, %v1893
      %v2142 = vpack.c.b16 %v1902, %v1894
      %v2143 = vpack.c.b16 %v1903, %v1895
      %v2144 = vpack.c.b16 %v1904, %v1896
      %v2145 = vpack.c.b16 %v1905, %v1897
      %v2146 = vpack.c.b16 %v1906, %v1898
      %v2147 = vpack.c.b16 %v1907, %v1899
      %v2148 = vpack.c.b16 %v1916, %v1908
      %v2149 = vpack.c.b16 %v1917, %v1909
      %v2150 = vpack.c.b16 %v1918, %v1910
      %v2151 = vpack.c.b16 %v1919, %v1911
      %v2152 = vpack.c.b16 %v1920, %v1912
      %v2153 = vpack.c.b16 %v1921, %v1913
      %v2154 = vpack.c.b16 %v1922, %v1914
      %v2155 = vpack.c.b16 %v1923, %v1915
      %v2156 = vpack.c.b16 %v1932, %v1924
      %v2157 = vpack.c.b16 %v1933, %v1925
      %v2158 = vpack.c.b16 %v1934, %v1926
      %v2159 = vpack.c.b16 %v1935, %v1927
      %v2160 = vpack.c.b16 %v1936, %v1928
      %v2161 = vpack.c.b16 %v1937, %v1929
      %v2162 = vpack.c.b16 %v1938, %v1930
      %v2163 = vpack.c.b16 %v1939, %v1931
      %v2164 = vpack.c.b16 %v1948, %v1940
      %v2165 = vpack.c.b16 %v1949, %v1941
      %v2166 = vpack.c.b16 %v1950, %v1942
      %v2167 = vpack.c.b16 %v1951, %v1943
      %v2168 = vpack.c.b16 %v1952, %v1944
      %v2169 = vpack.c.b16 %v1953, %v1945
      %v2170 = vpack.c.b16 %v1954, %v1946
      %v2171 = vpack.c.b16 %v1955, %v1947
      %v2172 = vpack.c.b16 %v1964, %v1956
      %v2173 = vpack.c.b16 %v1965, %v1957
      %v2174 = vpack.c.b16 %v1966, %v1958
      %v2175 = vpack.c.b16 %v1967, %v1959
      %v2176 = vpack.c.b16 %v1968, %v1960
      %v2177 = vpack.c.b16 %v1969, %v1961
      %v2178 = vpack.c.b16 %v1970, %v1962
      %v2179 = vpack.c.b16 %v1971, %v1963
      %v2180 = vpack.c.b16 %v1980, %v1972
      %v2181 = vpack.c.b16 %v1981, %v1973
      %v2182 = vpack.c.b16 %v1982, %v1974
      %v2183 = vpack.c.b16 %v1983, %v1975
      %v2184 = vpack.c.b16 %v1984, %v1976
      %v2185 = vpack.c.b16 %v1985, %v1977
      %v2186 = vpack.c.b16 %v1986, %v1978
      %v2187 = vpack.c.b16 %v1987, %v1979
      %v2188 = vpack.c.b16 %v1996, %v1988
      %v2189 = vpack.c.b16 %v1997, %v1989
      %v2190 = vpack.c.b16 %v1998, %v1990
      %v2191 = vpack.c.b16 %v1999, %v1991
      %v2192 = vpack.c.b16 %v2000, %v1992
      %v2193 = vpack.c.b16 %v2001, %v1993
      %v2194 = vpack.c.b16 %v2002, %v1994
      %v2195 = vpack.c.b16 %v2003, %v1995
      %v2196 = vpack.c.b16 %v2012, %v2004
      %v2197 = vpack.c.b16 %v2013, %v2005
      %v2198 = vpack.c.b16 %v2014, %v2006
      %v2199 = vpack.c.b16 %v2015, %v2007
      %v2200 = vpack.c.b16 %v2016, %v2008
      %v2201 = vpack.c.b16 %v2017, %v2009
      %v2202 = vpack.c.b16 %v2018, %v2010
      %v2203 = vpack.c.b16 %v2019, %v2011
      %v2204 = vpack.c.b16 %v2028, %v2020
      %v2205 = vpack.c.b16 %v2029, %v2021
      %v2206 = vpack.c.b16 %v2030, %v2022
      %v2207 = vpack.c.b16 %v2031, %v2023
      %v2208 = vpack.c.b16 %v2032, %v2024
      %v2209 = vpack.c.b16 %v2033, %v2025
      %v2210 = vpack.c.b16 %v2034, %v2026
      %v2211 = vpack.c.b16 %v2035, %v2027
      %v2212 = vpack.c.b16 %v2044, %v2036
      %v2213 = vpack.c.b16 %v2045, %v2037
      %v2214 = vpack.c.b16 %v2046, %v2038
      %v2215 = vpack.c.b16 %v2047, %v2039
      %v2216 = vpack.c.b16 %v2048, %v2040
      %v2217 = vpack.c.b16 %v2049, %v2041
      %v2218 = vpack.c.b16 %v2050, %v2042
      %v2219 = vpack.c.b16 %v2051, %v2043
      %v2220 = vpack.c.b16 %v2060, %v2052
      %v2221 = vpack.c.b16 %v2061, %v2053
      %v2222 = vpack.c.b16 %v2062, %v2054
      %v2223 = vpack.c.b16 %v2063, %v2055
      %v2224 = vpack.c.b16 %v2064, %v2056
      %v2225 = vpack.c.b16 %v2065, %v2057
      %v2226 = vpack.c.b16 %v2066, %v2058
      %v2227 = vpack.c.b16 %v2067, %v2059
      %v2228 = vpack.c.b16 %v2076, %v2068
      %v2229 = vpack.c.b16 %v2077, %v2069
      %v2230 = vpack.c.b16 %v2078, %v2070
      %v2231 = vpack.c.b16 %v2079, %v2071
      %v2232 = vpack.c.b16 %v2080, %v2072
      %v2233 = vpack.c.b16 %v2081, %v2073
      %v2234 = vpack.c.b16 %v2082, %v2074
      %v2235 = vpack.c.b16 %v2083, %v2075
      %v2236 = vpack.c.b16 %v2092, %v2084
      %v2237 = vpack.c.b16 %v2093, %v2085
      %v2238 = vpack.c.b16 %v2094, %v2086
      %v2239 = vpack.c.b16 %v2095, %v2087
      %v2240 = vpack.c.b16 %v2096, %v2088
      %v2241 = vpack.c.b16 %v2097, %v2089
      %v2242 = vpack.c.b16 %v2098, %v2090
      %v2243 = vpack.c.b16 %v2099, %v2091
      %v2244 = vpack.c.b16 %v2108, %v2100
      %v2245 = vpack.c.b16 %v2109, %v2101
      %v2246 = vpack.c.b16 %v2110, %v2102
      %v2247 = vpack.c.b16 %v2111, %v2103
      %v2248 = vpack.c.b16 %v2112, %v2104
      %v2249 = vpack.c.b16 %v2113, %v2105
      %v2250 = vpack.c.b16 %v2114, %v2106
      %v2251 = vpack.c.b16 %v2115, %v2107
      %v2252 = vpack.c.b16 %v2124, %v2116
      %v2253 = vpack.c.b16 %v2125, %v2117
      %v2254 = vpack.c.b16 %v2126, %v2118
      %v2255 = vpack.c.b16 %v2127, %v2119
      %v2256 = vpack.c.b16 %v2128, %v2120
      %v2257 = vpack.c.b16 %v2129, %v2121
      %v2258 = vpack.c.b16 %v2130, %v2122
      %v2259 = vpack.c.b16 %v2131, %v2123
      %2388 = vmatprep.subr.bf16.mxu0 %v2133
      %2389 = vmatpush1.bf16.msra.mxu0 %v2132
      %2390 = vmatprep.subr.bf16.mxu0 %v2141
      %2391 = vmatpush1.bf16.msra.mxu0 %v2140
      %2392 = vmatprep.subr.bf16.mxu0 %v2149
      %2393 = vmatpush1.bf16.msra.mxu0 %v2148
      %2394 = vmatprep.subr.bf16.mxu0 %v2157
      %2395 = vmatpush1.bf16.msra.mxu0 %v2156
      %2396 = vmatprep.subr.bf16.mxu0 %v2165
      %2397 = vmatpush1.bf16.msra.mxu0 %v2164
      %2398 = vmatprep.subr.bf16.mxu0 %v2173
      %2399 = vmatpush1.bf16.msra.mxu0 %v2172
      %2400 = vmatprep.subr.bf16.mxu0 %v2181
      %2401 = vmatpush1.bf16.msra.mxu0 %v2180
      %2402 = vmatprep.subr.bf16.mxu0 %v2189
      %2403 = vmatpush1.bf16.msra.mxu0 %v2188
      %2404 = vmatprep.subr.bf16.mxu0 %v2197
      %2405 = vmatpush1.bf16.msra.mxu0 %v2196
      %2406 = vmatprep.subr.bf16.mxu0 %v2205
      %2407 = vmatpush1.bf16.msra.mxu0 %v2204
      %2408 = vmatprep.subr.bf16.mxu0 %v2213
      %2409 = vmatpush1.bf16.msra.mxu0 %v2212
      %2410 = vmatprep.subr.bf16.mxu0 %v2221
      %2411 = vmatpush1.bf16.msra.mxu0 %v2220
      %2412 = vmatprep.subr.bf16.mxu0 %v2229
      %2413 = vmatpush1.bf16.msra.mxu0 %v2228
      %2414 = vmatprep.subr.bf16.mxu0 %v2237
      %2415 = vmatpush1.bf16.msra.mxu0 %v2236
      %2416 = vmatprep.subr.bf16.mxu0 %v2245
      %2417 = vmatpush1.bf16.msra.mxu0 %v2244
      %2418 = vmatprep.subr.bf16.mxu0 %v2253
      %2419 = vmatpush1.bf16.msra.mxu0 %v2252
      %2420 = vmatprep.mubr.bf16.mxu0 %v1619
      %2421 = vmatmul.mubr.bf16.gmra.mrb[0].mxu0 %v1618
      %v2422 = vpop.f32.mrb[0].mxu0
      %v2423 = vadd.f32 0.0, %v2422
      %v2424 = vpop.f32.mrb[0].mxu0
      %v2425 = vadd.f32 0.0, %v2424
      %v2426 = vpop.f32.mrb[0].mxu0
      %v2427 = vpop.f32.mrb[0].mxu0
      %2428 = vdwg.mxu0
      %2429 = vmatprep.subr.bf16.mxu0 %v2135
      %2430 = vmatpush1.bf16.msra.mxu0 %v2134
      %2431 = vmatprep.subr.bf16.mxu0 %v2143
      %2432 = vmatpush1.bf16.msra.mxu0 %v2142
      %2433 = vmatprep.subr.bf16.mxu0 %v2151
      %2434 = vmatpush1.bf16.msra.mxu0 %v2150
      %2435 = vmatprep.subr.bf16.mxu0 %v2159
      %2436 = vmatpush1.bf16.msra.mxu0 %v2158
      %2437 = vmatprep.subr.bf16.mxu0 %v2167
      %2438 = vmatpush1.bf16.msra.mxu0 %v2166
      %2439 = vmatprep.subr.bf16.mxu0 %v2175
      %2440 = vmatpush1.bf16.msra.mxu0 %v2174
      %2441 = vmatprep.subr.bf16.mxu0 %v2183
      %2442 = vmatpush1.bf16.msra.mxu0 %v2182
      %2443 = vmatprep.subr.bf16.mxu0 %v2191
      %2444 = vmatpush1.bf16.msra.mxu0 %v2190
      %2445 = vmatprep.subr.bf16.mxu0 %v2199
      %2446 = vmatpush1.bf16.msra.mxu0 %v2198
      %2447 = vmatprep.subr.bf16.mxu0 %v2207
      %2448 = vmatpush1.bf16.msra.mxu0 %v2206
      %2449 = vmatprep.subr.bf16.mxu0 %v2215
      %2450 = vmatpush1.bf16.msra.mxu0 %v2214
      %2451 = vmatprep.subr.bf16.mxu0 %v2223
      %2452 = vmatpush1.bf16.msra.mxu0 %v2222
      %2453 = vmatprep.subr.bf16.mxu0 %v2231
      %2454 = vmatpush1.bf16.msra.mxu0 %v2230
      %2455 = vmatprep.subr.bf16.mxu0 %v2239
      %2456 = vmatpush1.bf16.msra.mxu0 %v2238
      %2457 = vmatprep.subr.bf16.mxu0 %v2247
      %2458 = vmatpush1.bf16.msra.mxu0 %v2246
      %2459 = vmatprep.subr.bf16.mxu0 %v2255
      %2460 = vmatpush1.bf16.msra.mxu0 %v2254
      %2461 = vmatprep.mubr.bf16.mxu0 %v1619
      %2462 = vmatmul.mubr.bf16.gmra.mrb[0].mxu0 %v1618
      %v2463 = vpop.f32.mrb[0].mxu0
      %v2464 = vadd.f32 0.0, %v2463
      %v2465 = vpop.f32.mrb[0].mxu0
      %v2466 = vadd.f32 0.0, %v2465
      %v2467 = vpop.f32.mrb[0].mxu0
      %v2468 = vpop.f32.mrb[0].mxu0
      %2469 = vdwg.mxu0
      %2470 = vmatprep.subr.bf16.mxu0 %v2137
      %2471 = vmatpush1.bf16.msra.mxu0 %v2136
      %2472 = vmatprep.subr.bf16.mxu0 %v2145
      %2473 = vmatpush1.bf16.msra.mxu0 %v2144
      %2474 = vmatprep.subr.bf16.mxu0 %v2153
      %2475 = vmatpush1.bf16.msra.mxu0 %v2152
      %2476 = vmatprep.subr.bf16.mxu0 %v2161
      %2477 = vmatpush1.bf16.msra.mxu0 %v2160
      %2478 = vmatprep.subr.bf16.mxu0 %v2169
      %2479 = vmatpush1.bf16.msra.mxu0 %v2168
      %2480 = vmatprep.subr.bf16.mxu0 %v2177
      %2481 = vmatpush1.bf16.msra.mxu0 %v2176
      %2482 = vmatprep.subr.bf16.mxu0 %v2185
      %2483 = vmatpush1.bf16.msra.mxu0 %v2184
      %2484 = vmatprep.subr.bf16.mxu0 %v2193
      %2485 = vmatpush1.bf16.msra.mxu0 %v2192
      %2486 = vmatprep.subr.bf16.mxu0 %v2201
      %2487 = vmatpush1.bf16.msra.mxu0 %v2200
      %2488 = vmatprep.subr.bf16.mxu0 %v2209
      %2489 = vmatpush1.bf16.msra.mxu0 %v2208
      %2490 = vmatprep.subr.bf16.mxu0 %v2217
      %2491 = vmatpush1.bf16.msra.mxu0 %v2216
      %2492 = vmatprep.subr.bf16.mxu0 %v2225
      %2493 = vmatpush1.bf16.msra.mxu0 %v2224
      %2494 = vmatprep.subr.bf16.mxu0 %v2233
      %2495 = vmatpush1.bf16.msra.mxu0 %v2232
      %2496 = vmatprep.subr.bf16.mxu0 %v2241
      %2497 = vmatpush1.bf16.msra.mxu0 %v2240
      %2498 = vmatprep.subr.bf16.mxu0 %v2249
      %2499 = vmatpush1.bf16.msra.mxu0 %v2248
      %2500 = vmatprep.subr.bf16.mxu0 %v2257
      %2501 = vmatpush1.bf16.msra.mxu0 %v2256
      %2502 = vmatprep.mubr.bf16.mxu0 %v1619
      %2503 = vmatmul.mubr.bf16.gmra.mrb[0].mxu0 %v1618
      %v2504 = vpop.f32.mrb[0].mxu0
      %v2505 = vadd.f32 0.0, %v2504
      %v2506 = vpop.f32.mrb[0].mxu0
      %v2507 = vadd.f32 0.0, %v2506
      %v2508 = vpop.f32.mrb[0].mxu0
      %v2509 = vpop.f32.mrb[0].mxu0
      %2510 = vdwg.mxu0
      %2511 = vmatprep.subr.bf16.mxu0 %v2139
      %2512 = vmatpush1.bf16.msra.mxu0 %v2138
      %2513 = vmatprep.subr.bf16.mxu0 %v2147
      %2514 = vmatpush1.bf16.msra.mxu0 %v2146
      %2515 = vmatprep.subr.bf16.mxu0 %v2155
      %2516 = vmatpush1.bf16.msra.mxu0 %v2154
      %2517 = vmatprep.subr.bf16.mxu0 %v2163
      %2518 = vmatpush1.bf16.msra.mxu0 %v2162
      %2519 = vmatprep.subr.bf16.mxu0 %v2171
      %2520 = vmatpush1.bf16.msra.mxu0 %v2170
      %2521 = vmatprep.subr.bf16.mxu0 %v2179
      %2522 = vmatpush1.bf16.msra.mxu0 %v2178
      %2523 = vmatprep.subr.bf16.mxu0 %v2187
      %2524 = vmatpush1.bf16.msra.mxu0 %v2186
      %2525 = vmatprep.subr.bf16.mxu0 %v2195
      %2526 = vmatpush1.bf16.msra.mxu0 %v2194
      %2527 = vmatprep.subr.bf16.mxu0 %v2203
      %2528 = vmatpush1.bf16.msra.mxu0 %v2202
      %2529 = vmatprep.subr.bf16.mxu0 %v2211
      %2530 = vmatpush1.bf16.msra.mxu0 %v2210
      %2531 = vmatprep.subr.bf16.mxu0 %v2219
      %2532 = vmatpush1.bf16.msra.mxu0 %v2218
      %2533 = vmatprep.subr.bf16.mxu0 %v2227
      %2534 = vmatpush1.bf16.msra.mxu0 %v2226
      %2535 = vmatprep.subr.bf16.mxu0 %v2235
      %2536 = vmatpush1.bf16.msra.mxu0 %v2234
      %2537 = vmatprep.subr.bf16.mxu0 %v2243
      %2538 = vmatpush1.bf16.msra.mxu0 %v2242
      %2539 = vmatprep.subr.bf16.mxu0 %v2251
      %2540 = vmatpush1.bf16.msra.mxu0 %v2250
      %2541 = vmatprep.subr.bf16.mxu0 %v2259
      %2542 = vmatpush1.bf16.msra.mxu0 %v2258
      %2543 = vmatprep.mubr.bf16.mxu0 %v1619
      %2544 = vmatmul.mubr.bf16.gmra.mrb[0].mxu0 %v1618
      %v2545 = vpop.f32.mrb[0].mxu0
      %v2546 = vadd.f32 0.0, %v2545
      %v2547 = vpop.f32.mrb[0].mxu0
      %v2548 = vadd.f32 0.0, %v2547
      %v2549 = vpop.f32.mrb[0].mxu0
      %v2550 = vpop.f32.mrb[0].mxu0
      %2551 = vdwg.mxu0
      %v2560 = vcombine.low %v2423, %v2425
      %v2561 = vcombine.low %v2464, %v2466
      %v2562 = vcombine.low %v2505, %v2507
      %v2563 = vcombine.low %v2546, %v2548
      %2568 = vst [vmem:[%s511] sm:$0x77] %v2560
      %2569 = vst [vmem:[%s511 + $0x8] sm:$0x77] %v2561
      %2570 = vst [vmem:[%s511 + $0x10] sm:$0x77] %v2562
      %2571 = vst [vmem:[%s511 + $0x18] sm:$0x77] %v2563
      %v2580 = vcombine.low %v1138, %v1140
      %v2581 = vcombine.low %v1179, %v1181
      %v2582 = vcombine.low %v1220, %v1222
      %v2583 = vcombine.low %v1261, %v1263
      %v2585 = vunpack.c.l.s4 1966171168
      %v2586 = vunpack.c.0.s8 %v2585
      %v2587 = vlaneseq
      %v2588 = vshrl.u32 %v2587, 7
      %v2589 = vsub.s32 %v2586, %v2588
      %v2590 = vrot.slane %v2580, %v2589
      %v2592 = vunpack.c.l.s4 1966171168
      %v2593 = vunpack.c.0.s8 %v2592
      %v2594 = vlaneseq
      %v2595 = vshrl.u32 %v2594, 7
      %v2596 = vsub.s32 %v2593, %v2595
      %v2597 = vrot.slane %v2581, %v2596
      %v2599 = vunpack.c.l.s4 1966171168
      %v2600 = vunpack.c.0.s8 %v2599
      %v2601 = vlaneseq
      %v2602 = vshrl.u32 %v2601, 7
      %v2603 = vsub.s32 %v2600, %v2602
      %v2604 = vrot.slane %v2582, %v2603
      %v2606 = vunpack.c.l.s4 1966171168
      %v2607 = vunpack.c.0.s8 %v2606
      %v2608 = vlaneseq
      %v2609 = vshrl.u32 %v2608, 7
      %v2610 = vsub.s32 %v2607, %v2609
      %v2611 = vrot.slane %v2583, %v2610
      %v2612 = vcombine.low %v2590, %v2597
      %v2613 = vcombine.low %v2604, %v2611
      %v2615 = vunpack.c.l.s4 1966171168
      %v2616 = vunpack.c.0.s8 %v2615
      %v2617 = vlaneseq
      %v2618 = vshrl.u32 %v2617, 7
      %v2619 = vsub.s32 %v2616, %v2618
      %v2620 = vrot.slane %v2612, %v2619
      %v2622 = vunpack.c.l.s4 1966171168
      %v2623 = vunpack.c.0.s8 %v2622
      %v2624 = vlaneseq
      %v2625 = vshrl.u32 %v2624, 7
      %v2626 = vsub.s32 %v2623, %v2625
      %v2627 = vrot.slane %v2613, %v2626
      %v2628 = vcombine.low %v2620, %v2627
      %s2630 = scalar_lea.vmem %s511, 3
      %2631 = vst [vmem:[%s2630] ss:$4 sm:$0xff] %v2628
      %p2632 = scmp.lt.s32.totalorder %s26, 1
      %s2633 = scalar_select %p2632, %s26, 1
      %s2634 = smul.addr %s2633, 8
      %s2635 = smul.addr %s2634, 4
      %s2636 = scalar_lea.vmem %s15, %s2635
      // Predicated region
      $region81: #{flowisam_forward.1} parent=79 // pred_check
        %p2637 = pneg %p369
      $region82: #{flowisam_forward.1} parent=79 // pred_check_branch
        %2639 = sbr.rel (%p2637) target = $region84
      $region83: #{flowisam_forward.1} parent=79 // pred_region
        _
      $region84: #{flowisam_forward.1} parent=79 // pred_fallthru
        _
    $region80: #{flowisam_forward.1} parent=5 // pred_fallthru
      _
    %p2640 = scmp.le.s32.totalorder 2, %s21
    // Predicated region
    $region85: #{flowisam_forward.1} parent=5 // pred_check
      %p2641 = pneg %p2640
    $region86: #{flowisam_forward.1} parent=5 // pred_check_branch
      %2643 = sbr.rel (%p2641) target = $region88
    $region87: #{flowisam_forward.1} parent=5 // pred_region
      %s2644 = ssub.s32 %s21, 2
      // Predicated region
      $region89: #{flowisam_forward.1} parent=87 // pred_check
        %p2645 = pneg %p375
      $region90: #{flowisam_forward.1} parent=87 // pred_check_branch
        %2647 = sbr.rel (%p2645) target = $region92
      $region91: #{flowisam_forward.1} parent=87 // pred_region
        %p2648 = scmp.lt.s32.totalorder %s27, 1
        %s2649 = scalar_select %p2648, %s27, 1
        %s2650 = smul.addr %s2649, 8
        %s2651 = smul.addr %s2650, 4
        %s2652 = scalar_lea.vmem %s15, %s2651
      $region92: #{flowisam_forward.1} parent=87 // pred_fallthru
        _
    $region88: #{flowisam_forward.1} parent=5 // pred_fallthru
      _
  $region6: #{flowisam_forward.1} parent=0 // loop_footer
    %s25 = sadd.s32 1, %s21
  $region7: #{flowisam_forward.1} parent=0 // loop_footer_branch
    %20 = sbr.rel target = $region3
  $region8: #{flowisam_forward.1} parent=0 // loop_exit
    _

</llo_original>
